<compile_context>
chip_gen: v7x
topology: tpu7x:2x2x1
jax: 0.10.0
libtpu: 0.0.40
codegen_flags: <defaults>
</compile_context>

<pallas_src>
import math

import jax
import jax.numpy as jnp
from jax.experimental import pallas as pl
from jax.experimental.pallas import tpu as pltpu


# ----------------------------- config -------------------------------------
DIM = 32            # args.dim
N_HEADS = 4         # args.n_heads
N_KV_HEADS = 2      # args.n_kv_heads
HEAD_DIM = DIM // N_HEADS          # 8
N_REP = N_HEADS // N_KV_HEADS      # 2
MAX_BATCH = 4       # args.max_batch_size
MAX_SEQ = 16        # args.max_seq_len

BATCH = 2
SEQ_LEN = 1
START_POS = 4


# --------------------------- fused Pallas kernel ----------------------------
def fused_attention_kernel(x_ref, wq_ref, wk_ref, wv_ref, wo_ref,
                           cos_ref, sin_ref, kpast_ref, vpast_ref,
                           y_ref, knew_ref, vnew_ref, attn_ref):
    """Whole decode-step SelfAttention in one kernel invocation.

    Shapes (all static at trace time):
      x_ref      : (B*S, D)
      wq_ref     : (D, Hq*hd)   wk_ref/wv_ref : (D, Hkv*hd)   wo_ref : (Hq*hd, D)
      cos/sin    : (S, hd)      compact, pair-duplicated; broadcast in-kernel
      kpast/vpast: (B, start_pos, Hkv, hd)   -- past cache rows only
      y_ref      : (B*S, D)
      knew/vnew  : (B, S, Hkv, hd)  -- aliased cache block for the new rows
      attn_ref   : VMEM scratch (B*S, Hq*hd) -- lane-dense attention-output slab
    """
    B, P, n_kv, hd = kpast_ref.shape
    S = cos_ref.shape[0]
    Bs = x_ref.shape[0]                      # B * S
    n_q = wq_ref.shape[1] // hd
    n_rep = n_q // n_kv
    M = n_rep * S                            # rows per kv-group matmul (r-major, s-minor)
    scale = 1.0 / math.sqrt(hd)

    # ---- fused Q/K/V projections (three MXU matmuls on the full (B*S, D) slab) --
    x = x_ref[...]
    q = jnp.dot(x, wq_ref[...], preferred_element_type=jnp.float32)   # (Bs, Hq*hd)
    k = jnp.dot(x, wk_ref[...], preferred_element_type=jnp.float32)   # (Bs, Hkv*hd)
    v = jnp.dot(x, wv_ref[...], preferred_element_type=jnp.float32)   # (Bs, Hkv*hd)

    # ---- RoPE: even/odd lane swizzle (VPU) + broadcasted cos/sin ---------------
    # cos/sin arrive compact (S, hd); expand to (Bs, n*hd) with cheap concatenates
    # instead of shipping duplicated tables through HBM.
    cos_row = jnp.concatenate([cos_ref[...]] * B, axis=0)             # (Bs, hd)
    sin_row = jnp.concatenate([sin_ref[...]] * B, axis=0)

    def rope(t, n_heads):
        c = jnp.concatenate([cos_row] * n_heads, axis=1)              # (Bs, n*hd)
        s = jnp.concatenate([sin_row] * n_heads, axis=1)
        lane = jax.lax.broadcasted_iota(jnp.int32, t.shape, 1)
        is_even = (lane & 1) == 0
        # swap(t)[2i] = -t[2i+1] ; swap(t)[2i+1] = t[2i]   (interleaved-pair RoPE)
        t_swap = jnp.where(is_even,
                           -jnp.roll(t, -1, axis=1),
                           jnp.roll(t, 1, axis=1))
        return t * c + t_swap * s

    q = rope(q, n_q) * scale                 # fold 1/sqrt(hd) into q once
    k = rope(k, n_kv)

    # ---- attention per kv-group: batched over (batch, n_rep query heads) -------
    # Scores vs. the past cache rows and vs. the new rows are computed separately
    # and combined flash-style, so past/new K,V are never concatenated.
    dn_qk = (((2,), (2,)), ((0,), (0,)))     # contract hd, batch over B (no K transpose)
    dn_pv = (((2,), (1,)), ((0,), (0,)))     # contract L,  batch over B

    for g in range(n_kv):
        # New-row K/V for this group (also written back to the aliased cache block;
        # with a flattened lane-dense cache layout this becomes one unmasked store).
        k_new = k[:, g * hd:(g + 1) * hd].reshape(B, S, hd)            # (B, S, hd)
        v_new = v[:, g * hd:(g + 1) * hd].reshape(B, S, hd)
        knew_ref[:, :, g, :] = k_new
        vnew_ref[:, :, g, :] = v_new

        k_past = kpast_ref[:, :, g, :]                                 # (B, P, hd)
        v_past = vpast_ref[:, :, g, :]

        # Group all n_rep query heads: (B, n_rep*S, hd), rows ordered (r, s).
        q_g = jnp.concatenate(
            [q[:, (g * n_rep + r) * hd:(g * n_rep + r + 1) * hd].reshape(B, S, hd)
             for r in range(n_rep)], axis=1)                           # (B, M, hd)

        s_past = jax.lax.dot_general(q_g, k_past, dn_qk,
                                     preferred_element_type=jnp.float32)   # (B, M, P)
        s_new = jax.lax.dot_general(q_g, k_new, dn_qk,
                                    preferred_element_type=jnp.float32)    # (B, M, S)

        m = jnp.maximum(jnp.max(s_past, axis=-1, keepdims=True),
                        jnp.max(s_new, axis=-1, keepdims=True))
        p_past = jnp.exp(s_past - m)
        p_new = jnp.exp(s_new - m)
        denom = (jnp.sum(p_past, axis=-1, keepdims=True)
                 + jnp.sum(p_new, axis=-1, keepdims=True))
        inv = pl.reciprocal(denom, approx=True)                        # EUP slot

        o_g = (jax.lax.dot_general(p_past, v_past, dn_pv,
                                   preferred_element_type=jnp.float32)
               + jax.lax.dot_general(p_new, v_new, dn_pv,
                                     preferred_element_type=jnp.float32)) * inv

        # Store each head's result straight into the lane-dense output slab.
        for r in range(n_rep):
            h = g * n_rep + r
            attn_ref[:, h * hd:(h + 1) * hd] = (
                o_g[:, r * S:(r + 1) * S, :].reshape(Bs, hd))

    # ---- fused output projection (lane-dense slab -> MXU -> y) ------------------
    y_ref[...] = jnp.dot(attn_ref[...], wo_ref[...],
                         preferred_element_type=jnp.float32)


# ----------------------------- glue / wrapper -------------------------------
def self_attention_forward(x, start_pos, cos_hd, sin_hd, params_t,
                           cache_k, cache_v):
    """Fused Pallas forward.

    x: (B, S, DIM) f32; cos_hd/sin_hd: (S, HEAD_DIM) f32, pair-duplicated
    (built once per model, like the weight transposes);
    params_t: pre-transposed (wq.T, wk.T, wv.T, wo.T).
    Returns (y, cache_k_updated, cache_v_updated).
    """
    wq_t, wk_t, wv_t, wo_t = params_t
    B, S, D = x.shape
    P = start_pos
    f_q = N_HEADS * HEAD_DIM
    f_k = N_KV_HEADS * HEAD_DIM

    # start_pos is a trace-time Python int (as in the PyTorch module signature).
    # TODO(synk): a real decode loop should move it to scalar prefetch + masking
    # to avoid retracing per position.
    assert P > 0 and P % S == 0 and P + S <= cache_k.shape[1] and B <= cache_k.shape[0]

    x2 = x.reshape(B * S, D)

    y2, new_ck, new_cv = pl.pallas_call(
        fused_attention_kernel,
        grid=(1,),
        in_specs=[
            pl.BlockSpec((B * S, D), lambda i: (0, 0)),                    # x
            pl.BlockSpec((D, f_q), lambda i: (0, 0)),                      # wq^T
            pl.BlockSpec((D, f_k), lambda i: (0, 0)),                      # wk^T
            pl.BlockSpec((D, f_k), lambda i: (0, 0)),                      # wv^T
            pl.BlockSpec((f_q, D), lambda i: (0, 0)),                      # wo^T
            pl.BlockSpec((S, HEAD_DIM), lambda i: (0, 0)),                 # cos (compact)
            pl.BlockSpec((S, HEAD_DIM), lambda i: (0, 0)),                 # sin (compact)
            # Past K/V: only rows [0, start_pos), at N_KV_HEADS (no repeat_kv).
            pl.BlockSpec((B, P, N_KV_HEADS, HEAD_DIM), lambda i: (0, 0, 0, 0)),
            pl.BlockSpec((B, P, N_KV_HEADS, HEAD_DIM), lambda i: (0, 0, 0, 0)),
        ],
        out_specs=(
            pl.BlockSpec((B * S, D), lambda i: (0, 0)),                    # y
            # Cache outputs: write ONLY the S new rows; all other cache rows are
            # preserved through input_output_aliases (in-place update).  The write
            # position is encoded as a block index, hence start_pos % S == 0.
            pl.BlockSpec((B, S, N_KV_HEADS, HEAD_DIM),
                         lambda i: (0, P // S, 0, 0)),
            pl.BlockSpec((B, S, N_KV_HEADS, HEAD_DIM),
                         lambda i: (0, P // S, 0, 0)),
        ),
        out_shape=(
            jax.ShapeDtypeStruct((B * S, D), jnp.float32),
            jax.ShapeDtypeStruct(cache_k.shape, cache_k.dtype),
            jax.ShapeDtypeStruct(cache_v.shape, cache_v.dtype),
        ),
        scratch_shapes=[pltpu.VMEM((B * S, f_q), jnp.float32)],            # attn slab
        # inputs: 0:x 1:wq 2:wk 3:wv 4:wo 5:cos 6:sin 7:cache_k 8:cache_v
        input_output_aliases={7: 1, 8: 2},
        compiler_params=pltpu.CompilerParams(dimension_semantics=("arbitrary",)),
    )(x2, wq_t, wk_t, wv_t, wo_t, cos_hd, sin_hd, cache_k, cache_v)

    return y2.reshape(B, S, D), new_ck, new_cv


# ----------------------------- pure-JAX reference ---------------------------
def _rope_ref(x, cos, sin):
    B, S, H, hd = x.shape
    xr = x.reshape(B, S, H, hd // 2, 2)
    xa, xb = xr[..., 0], xr[..., 1]
    c = cos[None, :, None, :]
    s = sin[None, :, None, :]
    ra = xa * c - xb * s
    rb = xa * s + xb * c
    return jnp.stack([ra, rb], axis=-1).reshape(B, S, H, hd)


def reference_forward(x, start_pos, cos, sin, params, cache_k, cache_v):
    wq, wk, wv, wo = params
    B, S, D = x.shape
    L = start_pos + S
    xq = (x @ wq.T).reshape(B, S, N_HEADS, HEAD_DIM)
    xk = (x @ wk.T).reshape(B, S, N_KV_HEADS, HEAD_DIM)
    xv = (x @ wv.T).reshape(B, S, N_KV_HEADS, HEAD_DIM)
    xq = _rope_ref(xq, cos, sin)
    xk = _rope_ref(xk, cos, sin)
    cache_k = cache_k.at[:B, start_pos:start_pos + S].set(xk)
    cache_v = cache_v.at[:B, start_pos:start_pos + S].set(xv)
    keys = jnp.repeat(cache_k[:B, :L], N_REP, axis=2).transpose(0, 2, 1, 3)
    values = jnp.repeat(cache_v[:B, :L], N_REP, axis=2).transpose(0, 2, 1, 3)
    q = xq.transpose(0, 2, 1, 3)
    scores = jnp.einsum("bhsd,bhld->bhsl", q, keys) / math.sqrt(HEAD_DIM)
    scores = jax.nn.softmax(scores, axis=-1)
    out = jnp.einsum("bhsl,bhld->bhsd", scores, values)
    out = out.transpose(0, 2, 1, 3).reshape(B, S, -1)
    return out @ wo.T, cache_k, cache_v


# --------------------------------- main -------------------------------------
if __name__ == "__main__":
    key = jax.random.PRNGKey(0)
    k_wq, k_wk, k_wv, k_wo, k_x, k_ck, k_cv = jax.random.split(key, 7)

    scale_q = 1.0 / math.sqrt(DIM)
    wq = jax.random.uniform(k_wq, (N_HEADS * HEAD_DIM, DIM), jnp.float32,
                            -scale_q, scale_q)
    wk = jax.random.uniform(k_wk, (N_KV_HEADS * HEAD_DIM, DIM), jnp.float32,
                            -scale_q, scale_q)
    wv = jax.random.uniform(k_wv, (N_KV_HEADS * HEAD_DIM, DIM), jnp.float32,
                            -scale_q, scale_q)
    wo = jax.random.uniform(k_wo, (DIM, N_HEADS * HEAD_DIM), jnp.float32,
                            -scale_q, scale_q)
    params = (wq, wk, wv, wo)
    # Weight transposes hoisted out of the forward (done once, not per step).
    params_t = (wq.T, wk.T, wv.T, wo.T)

    x = jax.random.normal(k_x, (BATCH, SEQ_LEN, DIM), jnp.float32)

    # KV cache: zeros, with positions [0, START_POS) filled as if by earlier steps.
    cache_k = jnp.zeros((MAX_BATCH, MAX_SEQ, N_KV_HEADS, HEAD_DIM), jnp.float32)
    cache_v = jnp.zeros((MAX_BATCH, MAX_SEQ, N_KV_HEADS, HEAD_DIM), jnp.float32)
    cache_k = cache_k.at[:BATCH, :START_POS].set(
        0.1 * jax.random.normal(k_ck, (BATCH, START_POS, N_KV_HEADS, HEAD_DIM)))
    cache_v = cache_v.at[:BATCH, :START_POS].set(
        0.1 * jax.random.normal(k_cv, (BATCH, START_POS, N_KV_HEADS, HEAD_DIM)))

    # freqs_complex for positions [START_POS, START_POS + SEQ_LEN), as cos/sin.
    theta = 10000.0
    inv_freq = 1.0 / (theta ** (jnp.arange(0, HEAD_DIM, 2, dtype=jnp.float32)
                                / HEAD_DIM))              # (hd/2,)
    pos = jnp.arange(START_POS, START_POS + SEQ_LEN, dtype=jnp.float32)
    angles = jnp.outer(pos, inv_freq)                      # (S, hd/2)
    cos_half, sin_half = jnp.cos(angles), jnp.sin(angles)
    # Pair-duplicated rotary tables (S, hd) -- built once, like the weight
    # transposes; the kernel broadcasts them over batch and heads internally.
    cos_hd = jnp.repeat(cos_half, 2, axis=-1)
    sin_hd = jnp.repeat(sin_half, 2, axis=-1)

    y, new_ck, new_cv = self_attention_forward(
        x, START_POS, cos_hd, sin_hd, params_t, cache_k, cache_v)
    y = jax.block_until_ready(y)

    y_ref, ref_ck, ref_cv = reference_forward(
        x, START_POS, cos_half, sin_half, params, cache_k, cache_v)

    assert y.shape == (BATCH, SEQ_LEN, DIM)
    assert jnp.allclose(y, y_ref, atol=2e-3, rtol=2e-3), (
        "Pallas output mismatch vs pure-JAX reference")
    assert jnp.allclose(new_ck, ref_ck, atol=2e-3, rtol=2e-3), (
        "Pallas K-cache update mismatch vs reference")
    assert jnp.allclose(new_cv, ref_cv, atol=2e-3, rtol=2e-3), (
        "Pallas V-cache update mismatch vs reference")

    print("KERNEL_OK")
</pallas_src>

<mosaic_0001>
module attributes {stable_mosaic.version = 11 : i64} {
  func.func @fused_attention_kernel(%arg0: i32, %arg1: memref<2x32xf32, #tpu.memory_space<vmem>>, %arg2: memref<32x32xf32, #tpu.memory_space<vmem>>, %arg3: memref<32x16xf32, #tpu.memory_space<vmem>>, %arg4: memref<32x16xf32, #tpu.memory_space<vmem>>, %arg5: memref<32x32xf32, #tpu.memory_space<vmem>>, %arg6: memref<1x8xf32, #tpu.memory_space<vmem>>, %arg7: memref<1x8xf32, #tpu.memory_space<vmem>>, %arg8: memref<2x4x2x8xf32, #tpu.memory_space<vmem>>, %arg9: memref<2x4x2x8xf32, #tpu.memory_space<vmem>>, %arg10: memref<2x32xf32, #tpu.memory_space<vmem>>, %arg11: memref<2x1x2x8xf32, #tpu.memory_space<vmem>>, %arg12: memref<2x1x2x8xf32, #tpu.memory_space<vmem>>, %arg13: memref<2x32xf32, #tpu.memory_space<vmem>>) attributes {dimension_semantics = [#tpu.dimension_semantics<arbitrary>], iteration_bounds = array<i64: 1>, scalar_prefetch = 0 : i64, scratch_operands = 1 : i64, tpu.core_type = #tpu.core_type<tc>, window_params = [{pipeline_mode = #tpu.pipeline_mode<synchronous>, transform_indices = @transform_0, window_bounds = array<i64: 2, 32>}, {pipeline_mode = #tpu.pipeline_mode<synchronous>, transform_indices = @transform_1, window_bounds = array<i64: 32, 32>}, {pipeline_mode = #tpu.pipeline_mode<synchronous>, transform_indices = @transform_2, window_bounds = array<i64: 32, 16>}, {pipeline_mode = #tpu.pipeline_mode<synchronous>, transform_indices = @transform_3, window_bounds = array<i64: 32, 16>}, {pipeline_mode = #tpu.pipeline_mode<synchronous>, transform_indices = @transform_4, window_bounds = array<i64: 32, 32>}, {pipeline_mode = #tpu.pipeline_mode<synchronous>, transform_indices = @transform_5, window_bounds = array<i64: 1, 8>}, {pipeline_mode = #tpu.pipeline_mode<synchronous>, transform_indices = @transform_6, window_bounds = array<i64: 1, 8>}, {transform_indices = @transform_7, window_bounds = array<i64: 2, 4, 2, 8>}, {transform_indices = @transform_8, window_bounds = array<i64: 2, 4, 2, 8>}, {pipeline_mode = #tpu.pipeline_mode<synchronous>, transform_indices = @transform_9, window_bounds = array<i64: 2, 32>}, {transform_indices = @transform_10, window_bounds = array<i64: 2, 1, 2, 8>}, {transform_indices = @transform_11, window_bounds = array<i64: 2, 1, 2, 8>}]} {
    %c0 = arith.constant 0 : index
    %c0_0 = arith.constant 0 : index
    %0 = vector.load %arg1[%c0, %c0_0] : memref<2x32xf32, #tpu.memory_space<vmem>>, vector<2x32xf32>
    %c0_1 = arith.constant 0 : index
    %c0_2 = arith.constant 0 : index
    %1 = vector.load %arg2[%c0_1, %c0_2] : memref<32x32xf32, #tpu.memory_space<vmem>>, vector<32x32xf32>
    %cst = arith.constant dense<0.000000e+00> : vector<2x32xf32>
    %2 = tpu.matmul %0, %1, %cst {dimension_numbers = #tpu.dot_dimension_numbers<[1], [0], [0], [1], [0, 0, 1, 1], [], []>} : vector<2x32xf32>, vector<32x32xf32>, vector<2x32xf32> -> vector<2x32xf32>
    %c0_3 = arith.constant 0 : index
    %c0_4 = arith.constant 0 : index
    %3 = vector.load %arg3[%c0_3, %c0_4] : memref<32x16xf32, #tpu.memory_space<vmem>>, vector<32x16xf32>
    %cst_5 = arith.constant dense<0.000000e+00> : vector<2x16xf32>
    %4 = tpu.matmul %0, %3, %cst_5 {dimension_numbers = #tpu.dot_dimension_numbers<[1], [0], [0], [1], [0, 0, 1, 1], [], []>} : vector<2x32xf32>, vector<32x16xf32>, vector<2x16xf32> -> vector<2x16xf32>
    %c0_6 = arith.constant 0 : index
    %c0_7 = arith.constant 0 : index
    %5 = vector.load %arg4[%c0_6, %c0_7] : memref<32x16xf32, #tpu.memory_space<vmem>>, vector<32x16xf32>
    %cst_8 = arith.constant dense<0.000000e+00> : vector<2x16xf32>
    %6 = tpu.matmul %0, %5, %cst_8 {dimension_numbers = #tpu.dot_dimension_numbers<[1], [0], [0], [1], [0, 0, 1, 1], [], []>} : vector<2x32xf32>, vector<32x16xf32>, vector<2x16xf32> -> vector<2x16xf32>
    %c0_9 = arith.constant 0 : index
    %c0_10 = arith.constant 0 : index
    %7 = vector.load %arg6[%c0_9, %c0_10] : memref<1x8xf32, #tpu.memory_space<vmem>>, vector<1x8xf32>
    %8 = tpu.concatenate %7, %7 in 0 : vector<1x8xf32>, vector<1x8xf32> -> vector<2x8xf32>
    %c0_11 = arith.constant 0 : index
    %c0_12 = arith.constant 0 : index
    %9 = vector.load %arg7[%c0_11, %c0_12] : memref<1x8xf32, #tpu.memory_space<vmem>>, vector<1x8xf32>
    %10 = tpu.concatenate %9, %9 in 0 : vector<1x8xf32>, vector<1x8xf32> -> vector<2x8xf32>
    %11 = tpu.concatenate %8, %8, %8, %8 in 1 : vector<2x8xf32>, vector<2x8xf32>, vector<2x8xf32>, vector<2x8xf32> -> vector<2x32xf32>
    %12 = tpu.concatenate %10, %10, %10, %10 in 1 : vector<2x8xf32>, vector<2x8xf32>, vector<2x8xf32>, vector<2x8xf32> -> vector<2x32xf32>
    %13 = tpu.iota {dimensions = array<i32: 1>} : vector<2x32xi32>
    %c1_i32 = arith.constant 1 : i32
    %14 = vector.broadcast %c1_i32 : i32 to vector<2x32xi32>
    %15 = arith.andi %13, %14 : vector<2x32xi32>
    %c0_i32 = arith.constant 0 : i32
    %16 = vector.broadcast %c0_i32 : i32 to vector<2x32xi32>
    %17 = arith.cmpi eq, %15, %16 : vector<2x32xi32>
    %18 = vector.extract_strided_slice %2 {offsets = [0, 1], sizes = [2, 31], strides = [1, 1]} : vector<2x32xf32> to vector<2x31xf32>
    %19 = vector.extract_strided_slice %2 {offsets = [0, 0], sizes = [2, 1], strides = [1, 1]} : vector<2x32xf32> to vector<2x1xf32>
    %20 = tpu.concatenate %18, %19 in 1 : vector<2x31xf32>, vector<2x1xf32> -> vector<2x32xf32>
    %cst_13 = arith.constant 0.000000e+00 : f32
    %21 = vector.broadcast %cst_13 : f32 to vector<2x32xf32>
    %22 = arith.subf %21, %20 : vector<2x32xf32>
    %23 = vector.extract_strided_slice %2 {offsets = [0, 31], sizes = [2, 1], strides = [1, 1]} : vector<2x32xf32> to vector<2x1xf32>
    %24 = vector.extract_strided_slice %2 {offsets = [0, 0], sizes = [2, 31], strides = [1, 1]} : vector<2x32xf32> to vector<2x31xf32>
    %25 = tpu.concatenate %23, %24 in 1 : vector<2x1xf32>, vector<2x31xf32> -> vector<2x32xf32>
    %26 = arith.select %17, %22, %25 : vector<2x32xi1>, vector<2x32xf32>
    %27 = arith.mulf %2, %11 : vector<2x32xf32>
    %28 = arith.mulf %26, %12 : vector<2x32xf32>
    %29 = arith.addf %27, %28 : vector<2x32xf32>
    %cst_14 = arith.constant 0.353553385 : f32
    %30 = vector.broadcast %cst_14 : f32 to vector<2x32xf32>
    %31 = arith.mulf %29, %30 : vector<2x32xf32>
    %32 = tpu.concatenate %8, %8 in 1 : vector<2x8xf32>, vector<2x8xf32> -> vector<2x16xf32>
    %33 = tpu.concatenate %10, %10 in 1 : vector<2x8xf32>, vector<2x8xf32> -> vector<2x16xf32>
    %34 = tpu.iota {dimensions = array<i32: 1>} : vector<2x16xi32>
    %c1_i32_15 = arith.constant 1 : i32
    %35 = vector.broadcast %c1_i32_15 : i32 to vector<2x16xi32>
    %36 = arith.andi %34, %35 : vector<2x16xi32>
    %c0_i32_16 = arith.constant 0 : i32
    %37 = vector.broadcast %c0_i32_16 : i32 to vector<2x16xi32>
    %38 = arith.cmpi eq, %36, %37 : vector<2x16xi32>
    %39 = vector.extract_strided_slice %4 {offsets = [0, 1], sizes = [2, 15], strides = [1, 1]} : vector<2x16xf32> to vector<2x15xf32>
    %40 = vector.extract_strided_slice %4 {offsets = [0, 0], sizes = [2, 1], strides = [1, 1]} : vector<2x16xf32> to vector<2x1xf32>
    %41 = tpu.concatenate %39, %40 in 1 : vector<2x15xf32>, vector<2x1xf32> -> vector<2x16xf32>
    %cst_17 = arith.constant 0.000000e+00 : f32
    %42 = vector.broadcast %cst_17 : f32 to vector<2x16xf32>
    %43 = arith.subf %42, %41 : vector<2x16xf32>
    %44 = vector.extract_strided_slice %4 {offsets = [0, 15], sizes = [2, 1], strides = [1, 1]} : vector<2x16xf32> to vector<2x1xf32>
    %45 = vector.extract_strided_slice %4 {offsets = [0, 0], sizes = [2, 15], strides = [1, 1]} : vector<2x16xf32> to vector<2x15xf32>
    %46 = tpu.concatenate %44, %45 in 1 : vector<2x1xf32>, vector<2x15xf32> -> vector<2x16xf32>
    %47 = arith.select %38, %43, %46 : vector<2x16xi1>, vector<2x16xf32>
    %48 = arith.mulf %4, %32 : vector<2x16xf32>
    %49 = arith.mulf %47, %33 : vector<2x16xf32>
    %50 = arith.addf %48, %49 : vector<2x16xf32>
    %51 = vector.extract_strided_slice %50 {offsets = [0, 0], sizes = [2, 8], strides = [1, 1]} : vector<2x16xf32> to vector<2x8xf32>
    %52 = vector.shape_cast %51 : vector<2x8xf32> to vector<2x1x8xf32>
    %53 = vector.extract_strided_slice %6 {offsets = [0, 0], sizes = [2, 8], strides = [1, 1]} : vector<2x16xf32> to vector<2x8xf32>
    %54 = vector.shape_cast %53 : vector<2x8xf32> to vector<2x1x8xf32>
    %c0_18 = arith.constant 0 : index
    %c0_19 = arith.constant 0 : index
    %c0_20 = arith.constant 0 : index
    %c0_21 = arith.constant 0 : index
    %55 = vector.load %arg11[%c0_18, %c0_19, %c0_20, %c0_21] : memref<2x1x2x8xf32, #tpu.memory_space<vmem>>, vector<2x1x1x8xf32>
    %56 = vector.shape_cast %55 : vector<2x1x1x8xf32> to vector<2x1x8xf32>
    %57 = vector.shape_cast %52 : vector<2x1x8xf32> to vector<2x1x1x8xf32>
    tpu.vector_store %arg11[%c0_18, %c0_19, %c0_20, %c0_21], %57 {strides = array<i32>} : memref<2x1x2x8xf32, #tpu.memory_space<vmem>>, vector<2x1x1x8xf32>,
    %c0_22 = arith.constant 0 : index
    %c0_23 = arith.constant 0 : index
    %c0_24 = arith.constant 0 : index
    %c0_25 = arith.constant 0 : index
    %58 = vector.load %arg12[%c0_22, %c0_23, %c0_24, %c0_25] : memref<2x1x2x8xf32, #tpu.memory_space<vmem>>, vector<2x1x1x8xf32>
    %59 = vector.shape_cast %58 : vector<2x1x1x8xf32> to vector<2x1x8xf32>
    %60 = vector.shape_cast %54 : vector<2x1x8xf32> to vector<2x1x1x8xf32>
    tpu.vector_store %arg12[%c0_22, %c0_23, %c0_24, %c0_25], %60 {strides = array<i32>} : memref<2x1x2x8xf32, #tpu.memory_space<vmem>>, vector<2x1x1x8xf32>,
    %c0_26 = arith.constant 0 : index
    %c0_27 = arith.constant 0 : index
    %c0_28 = arith.constant 0 : index
    %c0_29 = arith.constant 0 : index
    %61 = vector.load %arg8[%c0_26, %c0_27, %c0_28, %c0_29] : memref<2x4x2x8xf32, #tpu.memory_space<vmem>>, vector<2x4x1x8xf32>
    %62 = vector.shape_cast %61 : vector<2x4x1x8xf32> to vector<2x4x8xf32>
    %c0_30 = arith.constant 0 : index
    %c0_31 = arith.constant 0 : index
    %c0_32 = arith.constant 0 : index
    %c0_33 = arith.constant 0 : index
    %63 = vector.load %arg9[%c0_30, %c0_31, %c0_32, %c0_33] : memref<2x4x2x8xf32, #tpu.memory_space<vmem>>, vector<2x4x1x8xf32>
    %64 = vector.shape_cast %63 : vector<2x4x1x8xf32> to vector<2x4x8xf32>
    %65 = vector.extract_strided_slice %31 {offsets = [0, 0], sizes = [2, 8], strides = [1, 1]} : vector<2x32xf32> to vector<2x8xf32>
    %66 = vector.shape_cast %65 : vector<2x8xf32> to vector<2x1x8xf32>
    %67 = vector.extract_strided_slice %31 {offsets = [0, 8], sizes = [2, 8], strides = [1, 1]} : vector<2x32xf32> to vector<2x8xf32>
    %68 = vector.shape_cast %67 : vector<2x8xf32> to vector<2x1x8xf32>
    %69 = tpu.concatenate %66, %68 in 1 : vector<2x1x8xf32>, vector<2x1x8xf32> -> vector<2x2x8xf32>
    %cst_34 = arith.constant dense<0.000000e+00> : vector<2x2x4xf32>
    %70 = tpu.matmul %69, %62, %cst_34 {dimension_numbers = #tpu.dot_dimension_numbers<[2], [2], [1], [1], [0, 0, 0, 1, 1, 1], [0], [0]>} : vector<2x2x8xf32>, vector<2x4x8xf32>, vector<2x2x4xf32> -> vector<2x2x4xf32>
    %cst_35 = arith.constant dense<0.000000e+00> : vector<2x2x1xf32>
    %71 = tpu.matmul %69, %52, %cst_35 {dimension_numbers = #tpu.dot_dimension_numbers<[2], [2], [1], [1], [0, 0, 0, 1, 1, 1], [0], [0]>} : vector<2x2x8xf32>, vector<2x1x8xf32>, vector<2x2x1xf32> -> vector<2x2x1xf32>
    %cst_36 = arith.constant dense<0xFF800000> : vector<2x2xf32>
    %72 = vector.multi_reduction <maximumf>, %70, %cst_36 [2] : vector<2x2x4xf32> to vector<2x2xf32>
    %73 = vector.shape_cast %72 : vector<2x2xf32> to vector<2x2x1xf32>
    %cst_37 = arith.constant dense<0xFF800000> : vector<2x2xf32>
    %74 = vector.multi_reduction <maximumf>, %71, %cst_37 [2] : vector<2x2x1xf32> to vector<2x2xf32>
    %75 = vector.shape_cast %74 : vector<2x2xf32> to vector<2x2x1xf32>
    %76 = arith.maximumf %73, %75 : vector<2x2x1xf32>
    %77 = vector.broadcast %76 : vector<2x2x1xf32> to vector<2x2x4xf32>
    %78 = arith.subf %70, %77 : vector<2x2x4xf32>
    %79 = math.exp %78 : vector<2x2x4xf32>
    %80 = arith.subf %71, %76 : vector<2x2x1xf32>
    %81 = math.exp %80 : vector<2x2x1xf32>
    %cst_38 = arith.constant dense<0.000000e+00> : vector<2x2xf32>
    %82 = vector.multi_reduction <add>, %79, %cst_38 [2] : vector<2x2x4xf32> to vector<2x2xf32>
    %83 = vector.shape_cast %82 : vector<2x2xf32> to vector<2x2x1xf32>
    %cst_39 = arith.constant dense<0.000000e+00> : vector<2x2xf32>
    %84 = vector.multi_reduction <add>, %81, %cst_39 [2] : vector<2x2x1xf32> to vector<2x2xf32>
    %85 = vector.shape_cast %84 : vector<2x2xf32> to vector<2x2x1xf32>
    %86 = arith.addf %83, %85 : vector<2x2x1xf32>
    %87 = tpu.reciprocal %86 {approx = true} : vector<2x2x1xf32> -> vector<2x2x1xf32>
    %cst_40 = arith.constant dense<0.000000e+00> : vector<2x2x8xf32>
    %88 = tpu.matmul %79, %64, %cst_40 {dimension_numbers = #tpu.dot_dimension_numbers<[2], [1], [1], [2], [0, 0, 0, 1, 1, 2], [0], [0]>} : vector<2x2x4xf32>, vector<2x4x8xf32>, vector<2x2x8xf32> -> vector<2x2x8xf32>
    %cst_41 = arith.constant dense<0.000000e+00> : vector<2x2x8xf32>
    %89 = tpu.matmul %81, %54, %cst_41 {dimension_numbers = #tpu.dot_dimension_numbers<[2], [1], [1], [2], [0, 0, 0, 1, 1, 2], [0], [0]>} : vector<2x2x1xf32>, vector<2x1x8xf32>, vector<2x2x8xf32> -> vector<2x2x8xf32>
    %90 = arith.addf %88, %89 : vector<2x2x8xf32>
    %91 = vector.broadcast %87 : vector<2x2x1xf32> to vector<2x2x8xf32>
    %92 = arith.mulf %90, %91 : vector<2x2x8xf32>
    %93 = vector.extract_strided_slice %92 {offsets = [0, 0, 0], sizes = [2, 1, 8], strides = [1, 1, 1]} : vector<2x2x8xf32> to vector<2x1x8xf32>
    %94 = vector.shape_cast %93 : vector<2x1x8xf32> to vector<2x8xf32>
    %c0_42 = arith.constant 0 : index
    %c0_43 = arith.constant 0 : index
    %95 = vector.load %arg13[%c0_42, %c0_43] : memref<2x32xf32, #tpu.memory_space<vmem>>, vector<2x8xf32>
    tpu.vector_store %arg13[%c0_42, %c0_43], %94 {strides = array<i32>} : memref<2x32xf32, #tpu.memory_space<vmem>>, vector<2x8xf32>,
    %96 = vector.extract_strided_slice %92 {offsets = [0, 1, 0], sizes = [2, 1, 8], strides = [1, 1, 1]} : vector<2x2x8xf32> to vector<2x1x8xf32>
    %97 = vector.shape_cast %96 : vector<2x1x8xf32> to vector<2x8xf32>
    %c0_44 = arith.constant 0 : index
    %c8 = arith.constant 8 : index
    %98 = vector.load %arg13[%c0_44, %c8] : memref<2x32xf32, #tpu.memory_space<vmem>>, vector<2x8xf32>
    tpu.vector_store %arg13[%c0_44, %c8], %97 {strides = array<i32>} : memref<2x32xf32, #tpu.memory_space<vmem>>, vector<2x8xf32>,
    %99 = vector.extract_strided_slice %50 {offsets = [0, 8], sizes = [2, 8], strides = [1, 1]} : vector<2x16xf32> to vector<2x8xf32>
    %100 = vector.shape_cast %99 : vector<2x8xf32> to vector<2x1x8xf32>
    %101 = vector.extract_strided_slice %6 {offsets = [0, 8], sizes = [2, 8], strides = [1, 1]} : vector<2x16xf32> to vector<2x8xf32>
    %102 = vector.shape_cast %101 : vector<2x8xf32> to vector<2x1x8xf32>
    %c0_45 = arith.constant 0 : index
    %c0_46 = arith.constant 0 : index
    %c1 = arith.constant 1 : index
    %c0_47 = arith.constant 0 : index
    %103 = vector.load %arg11[%c0_45, %c0_46, %c1, %c0_47] : memref<2x1x2x8xf32, #tpu.memory_space<vmem>>, vector<2x1x1x8xf32>
    %104 = vector.shape_cast %103 : vector<2x1x1x8xf32> to vector<2x1x8xf32>
    %105 = vector.shape_cast %100 : vector<2x1x8xf32> to vector<2x1x1x8xf32>
    tpu.vector_store %arg11[%c0_45, %c0_46, %c1, %c0_47], %105 {strides = array<i32>} : memref<2x1x2x8xf32, #tpu.memory_space<vmem>>, vector<2x1x1x8xf32>,
    %c0_48 = arith.constant 0 : index
    %c0_49 = arith.constant 0 : index
    %c1_50 = arith.constant 1 : index
    %c0_51 = arith.constant 0 : index
    %106 = vector.load %arg12[%c0_48, %c0_49, %c1_50, %c0_51] : memref<2x1x2x8xf32, #tpu.memory_space<vmem>>, vector<2x1x1x8xf32>
    %107 = vector.shape_cast %106 : vector<2x1x1x8xf32> to vector<2x1x8xf32>
    %108 = vector.shape_cast %102 : vector<2x1x8xf32> to vector<2x1x1x8xf32>
    tpu.vector_store %arg12[%c0_48, %c0_49, %c1_50, %c0_51], %108 {strides = array<i32>} : memref<2x1x2x8xf32, #tpu.memory_space<vmem>>, vector<2x1x1x8xf32>,
    %c0_52 = arith.constant 0 : index
    %c0_53 = arith.constant 0 : index
    %c1_54 = arith.constant 1 : index
    %c0_55 = arith.constant 0 : index
    %109 = vector.load %arg8[%c0_52, %c0_53, %c1_54, %c0_55] : memref<2x4x2x8xf32, #tpu.memory_space<vmem>>, vector<2x4x1x8xf32>
    %110 = vector.shape_cast %109 : vector<2x4x1x8xf32> to vector<2x4x8xf32>
    %c0_56 = arith.constant 0 : index
    %c0_57 = arith.constant 0 : index
    %c1_58 = arith.constant 1 : index
    %c0_59 = arith.constant 0 : index
    %111 = vector.load %arg9[%c0_56, %c0_57, %c1_58, %c0_59] : memref<2x4x2x8xf32, #tpu.memory_space<vmem>>, vector<2x4x1x8xf32>
    %112 = vector.shape_cast %111 : vector<2x4x1x8xf32> to vector<2x4x8xf32>
    %113 = vector.extract_strided_slice %31 {offsets = [0, 16], sizes = [2, 8], strides = [1, 1]} : vector<2x32xf32> to vector<2x8xf32>
    %114 = vector.shape_cast %113 : vector<2x8xf32> to vector<2x1x8xf32>
    %115 = vector.extract_strided_slice %31 {offsets = [0, 24], sizes = [2, 8], strides = [1, 1]} : vector<2x32xf32> to vector<2x8xf32>
    %116 = vector.shape_cast %115 : vector<2x8xf32> to vector<2x1x8xf32>
    %117 = tpu.concatenate %114, %116 in 1 : vector<2x1x8xf32>, vector<2x1x8xf32> -> vector<2x2x8xf32>
    %cst_60 = arith.constant dense<0.000000e+00> : vector<2x2x4xf32>
    %118 = tpu.matmul %117, %110, %cst_60 {dimension_numbers = #tpu.dot_dimension_numbers<[2], [2], [1], [1], [0, 0, 0, 1, 1, 1], [0], [0]>} : vector<2x2x8xf32>, vector<2x4x8xf32>, vector<2x2x4xf32> -> vector<2x2x4xf32>
    %cst_61 = arith.constant dense<0.000000e+00> : vector<2x2x1xf32>
    %119 = tpu.matmul %117, %100, %cst_61 {dimension_numbers = #tpu.dot_dimension_numbers<[2], [2], [1], [1], [0, 0, 0, 1, 1, 1], [0], [0]>} : vector<2x2x8xf32>, vector<2x1x8xf32>, vector<2x2x1xf32> -> vector<2x2x1xf32>
    %cst_62 = arith.constant dense<0xFF800000> : vector<2x2xf32>
    %120 = vector.multi_reduction <maximumf>, %118, %cst_62 [2] : vector<2x2x4xf32> to vector<2x2xf32>
    %121 = vector.shape_cast %120 : vector<2x2xf32> to vector<2x2x1xf32>
    %cst_63 = arith.constant dense<0xFF800000> : vector<2x2xf32>
    %122 = vector.multi_reduction <maximumf>, %119, %cst_63 [2] : vector<2x2x1xf32> to vector<2x2xf32>
    %123 = vector.shape_cast %122 : vector<2x2xf32> to vector<2x2x1xf32>
    %124 = arith.maximumf %121, %123 : vector<2x2x1xf32>
    %125 = vector.broadcast %124 : vector<2x2x1xf32> to vector<2x2x4xf32>
    %126 = arith.subf %118, %125 : vector<2x2x4xf32>
    %127 = math.exp %126 : vector<2x2x4xf32>
    %128 = arith.subf %119, %124 : vector<2x2x1xf32>
    %129 = math.exp %128 : vector<2x2x1xf32>
    %cst_64 = arith.constant dense<0.000000e+00> : vector<2x2xf32>
    %130 = vector.multi_reduction <add>, %127, %cst_64 [2] : vector<2x2x4xf32> to vector<2x2xf32>
    %131 = vector.shape_cast %130 : vector<2x2xf32> to vector<2x2x1xf32>
    %cst_65 = arith.constant dense<0.000000e+00> : vector<2x2xf32>
    %132 = vector.multi_reduction <add>, %129, %cst_65 [2] : vector<2x2x1xf32> to vector<2x2xf32>
    %133 = vector.shape_cast %132 : vector<2x2xf32> to vector<2x2x1xf32>
    %134 = arith.addf %131, %133 : vector<2x2x1xf32>
    %135 = tpu.reciprocal %134 {approx = true} : vector<2x2x1xf32> -> vector<2x2x1xf32>
    %cst_66 = arith.constant dense<0.000000e+00> : vector<2x2x8xf32>
    %136 = tpu.matmul %127, %112, %cst_66 {dimension_numbers = #tpu.dot_dimension_numbers<[2], [1], [1], [2], [0, 0, 0, 1, 1, 2], [0], [0]>} : vector<2x2x4xf32>, vector<2x4x8xf32>, vector<2x2x8xf32> -> vector<2x2x8xf32>
    %cst_67 = arith.constant dense<0.000000e+00> : vector<2x2x8xf32>
    %137 = tpu.matmul %129, %102, %cst_67 {dimension_numbers = #tpu.dot_dimension_numbers<[2], [1], [1], [2], [0, 0, 0, 1, 1, 2], [0], [0]>} : vector<2x2x1xf32>, vector<2x1x8xf32>, vector<2x2x8xf32> -> vector<2x2x8xf32>
    %138 = arith.addf %136, %137 : vector<2x2x8xf32>
    %139 = vector.broadcast %135 : vector<2x2x1xf32> to vector<2x2x8xf32>
    %140 = arith.mulf %138, %139 : vector<2x2x8xf32>
    %141 = vector.extract_strided_slice %140 {offsets = [0, 0, 0], sizes = [2, 1, 8], strides = [1, 1, 1]} : vector<2x2x8xf32> to vector<2x1x8xf32>
    %142 = vector.shape_cast %141 : vector<2x1x8xf32> to vector<2x8xf32>
    %c0_68 = arith.constant 0 : index
    %c16 = arith.constant 16 : index
    %143 = vector.load %arg13[%c0_68, %c16] : memref<2x32xf32, #tpu.memory_space<vmem>>, vector<2x8xf32>
    tpu.vector_store %arg13[%c0_68, %c16], %142 {strides = array<i32>} : memref<2x32xf32, #tpu.memory_space<vmem>>, vector<2x8xf32>,
    %144 = vector.extract_strided_slice %140 {offsets = [0, 1, 0], sizes = [2, 1, 8], strides = [1, 1, 1]} : vector<2x2x8xf32> to vector<2x1x8xf32>
    %145 = vector.shape_cast %144 : vector<2x1x8xf32> to vector<2x8xf32>
    %c0_69 = arith.constant 0 : index
    %c24 = arith.constant 24 : index
    %146 = vector.load %arg13[%c0_69, %c24] : memref<2x32xf32, #tpu.memory_space<vmem>>, vector<2x8xf32>
    tpu.vector_store %arg13[%c0_69, %c24], %145 {strides = array<i32>} : memref<2x32xf32, #tpu.memory_space<vmem>>, vector<2x8xf32>,
    %c0_70 = arith.constant 0 : index
    %c0_71 = arith.constant 0 : index
    %147 = vector.load %arg13[%c0_70, %c0_71] : memref<2x32xf32, #tpu.memory_space<vmem>>, vector<2x32xf32>
    %c0_72 = arith.constant 0 : index
    %c0_73 = arith.constant 0 : index
    %148 = vector.load %arg5[%c0_72, %c0_73] : memref<32x32xf32, #tpu.memory_space<vmem>>, vector<32x32xf32>
    %cst_74 = arith.constant dense<0.000000e+00> : vector<2x32xf32>
    %149 = tpu.matmul %147, %148, %cst_74 {dimension_numbers = #tpu.dot_dimension_numbers<[1], [0], [0], [1], [0, 0, 1, 1], [], []>} : vector<2x32xf32>, vector<32x32xf32>, vector<2x32xf32> -> vector<2x32xf32>
    %c0_75 = arith.constant 0 : index
    %c0_76 = arith.constant 0 : index
    %150 = vector.load %arg10[%c0_75, %c0_76] : memref<2x32xf32, #tpu.memory_space<vmem>>, vector<2x32xf32>
    tpu.vector_store %arg10[%c0_75, %c0_76], %149 {strides = array<i32>} : memref<2x32xf32, #tpu.memory_space<vmem>>, vector<2x32xf32>,
    return
  }
  func.func @transform_0(%arg0: i32) -> (i32, i32) {
    %c0_i32 = arith.constant 0 : i32
    %c0_i32_0 = arith.constant 0 : i32
    %c0_i32_1 = arith.constant 0 : i32
    return %c0_i32, %c0_i32_0 : i32, i32
  }
  func.func @transform_1(%arg0: i32) -> (i32, i32) {
    %c0_i32 = arith.constant 0 : i32
    %c0_i32_0 = arith.constant 0 : i32
    %c0_i32_1 = arith.constant 0 : i32
    return %c0_i32, %c0_i32_0 : i32, i32
  }
  func.func @transform_2(%arg0: i32) -> (i32, i32) {
    %c0_i32 = arith.constant 0 : i32
    %c0_i32_0 = arith.constant 0 : i32
    %c0_i32_1 = arith.constant 0 : i32
    return %c0_i32, %c0_i32_0 : i32, i32
  }
  func.func @transform_3(%arg0: i32) -> (i32, i32) {
    %c0_i32 = arith.constant 0 : i32
    %c0_i32_0 = arith.constant 0 : i32
    %c0_i32_1 = arith.constant 0 : i32
    return %c0_i32, %c0_i32_0 : i32, i32
  }
  func.func @transform_4(%arg0: i32) -> (i32, i32) {
    %c0_i32 = arith.constant 0 : i32
    %c0_i32_0 = arith.constant 0 : i32
    %c0_i32_1 = arith.constant 0 : i32
    return %c0_i32, %c0_i32_0 : i32, i32
  }
  func.func @transform_5(%arg0: i32) -> (i32, i32) {
    %c0_i32 = arith.constant 0 : i32
    %c0_i32_0 = arith.constant 0 : i32
    %c0_i32_1 = arith.constant 0 : i32
    return %c0_i32, %c0_i32_0 : i32, i32
  }
  func.func @transform_6(%arg0: i32) -> (i32, i32) {
    %c0_i32 = arith.constant 0 : i32
    %c0_i32_0 = arith.constant 0 : i32
    %c0_i32_1 = arith.constant 0 : i32
    return %c0_i32, %c0_i32_0 : i32, i32
  }
  func.func @transform_7(%arg0: i32) -> (i32, i32, i32, i32) {
    %c0_i32 = arith.constant 0 : i32
    %c0_i32_0 = arith.constant 0 : i32
    %c0_i32_1 = arith.constant 0 : i32
    %c0_i32_2 = arith.constant 0 : i32
    %c0_i32_3 = arith.constant 0 : i32
    return %c0_i32, %c0_i32_0, %c0_i32_1, %c0_i32_2 : i32, i32, i32, i32
  }
  func.func @transform_8(%arg0: i32) -> (i32, i32, i32, i32) {
    %c0_i32 = arith.constant 0 : i32
    %c0_i32_0 = arith.constant 0 : i32
    %c0_i32_1 = arith.constant 0 : i32
    %c0_i32_2 = arith.constant 0 : i32
    %c0_i32_3 = arith.constant 0 : i32
    return %c0_i32, %c0_i32_0, %c0_i32_1, %c0_i32_2 : i32, i32, i32, i32
  }
  func.func @transform_9(%arg0: i32) -> (i32, i32) {
    %c0_i32 = arith.constant 0 : i32
    %c0_i32_0 = arith.constant 0 : i32
    %c0_i32_1 = arith.constant 0 : i32
    return %c0_i32, %c0_i32_0 : i32, i32
  }
  func.func @transform_10(%arg0: i32) -> (i32, i32, i32, i32) {
    %c0_i32 = arith.constant 0 : i32
    %c4_i32 = arith.constant 4 : i32
    %c0_i32_0 = arith.constant 0 : i32
    %c0_i32_1 = arith.constant 0 : i32
    %c0_i32_2 = arith.constant 0 : i32
    return %c0_i32, %c4_i32, %c0_i32_0, %c0_i32_1 : i32, i32, i32, i32
  }
  func.func @transform_11(%arg0: i32) -> (i32, i32, i32, i32) {
    %c0_i32 = arith.constant 0 : i32
    %c4_i32 = arith.constant 4 : i32
    %c0_i32_0 = arith.constant 0 : i32
    %c0_i32_1 = arith.constant 0 : i32
    %c0_i32_2 = arith.constant 0 : i32
    return %c0_i32, %c4_i32, %c0_i32_0, %c0_i32_1 : i32, i32, i32, i32
  }
}

</mosaic_0001>

<llo_original>
// kernel: tpu_custom_call.1
$region0: #{tpu_custom_call.1}
  #allocation0 [shape = 'u32[]', space=smem, size = 0x4, offset = 0x4, fixed_abs, tag = 'smem constant byte address 0x4 - core index']
  #allocation1 [shape = 'u32[144,128]{1,0:T(1,128)}', space=vmem, size = 0x12000, scoped, tag = 'internal scratch']
  #allocation2 [shape = 'f32[2,32]{1,0:T(2,128)}', space=vmem, size = 0x400, scoped, tag = 'scratch operand']
  %s0 = inlined_call_operand.vmem [shape: f32[2,32], index: 0, kind: input, shape index: {}]
  %s1 = inlined_call_operand.vmem [shape: f32[32,32], index: 1, kind: input, shape index: {}]
  %s2 = inlined_call_operand.vmem [shape: f32[32,16], index: 2, kind: input, shape index: {}]
  %s3 = inlined_call_operand.vmem [shape: f32[32,16], index: 3, kind: input, shape index: {}]
  %s4 = inlined_call_operand.vmem [shape: f32[32,32], index: 4, kind: input, shape index: {}]
  %s5 = inlined_call_operand.vmem [shape: f32[1,8], index: 5, kind: input, shape index: {}]
  %s6 = inlined_call_operand.vmem [shape: f32[1,8], index: 6, kind: input, shape index: {}]
  %s7 = inlined_call_operand.vmem [shape: f32[4,16,2,8], index: 7, kind: input, shape index: {}, may-alias: {7,10}]
  %s8 = inlined_call_operand.vmem [shape: f32[4,16,2,8], index: 8, kind: input, shape index: {}, may-alias: {8,11}]
  %s9 = inlined_call_operand.hbm [shape: f32[2,32], index: 9, kind: output, shape index: {0}]
  %s10 = inlined_call_operand.vmem [shape: f32[4,16,2,8], index: 10, kind: output, shape index: {1}, may-alias: {7,10}]
  %s11 = inlined_call_operand.vmem [shape: f32[4,16,2,8], index: 11, kind: output, shape index: {2}, may-alias: {8,11}]
  %12 = xla_tuple %s9, %s10, %s11
  %s13 = sld [smem:[#allocation0]]
  $region204: #{tpu_custom_call.1} parent=0
    _
  %s15 = ssub.s32 1, %s13
  %s16 = scalar_select 0, %s15, %s13
  $region1: #{tpu_custom_call.1} parent=0
    #allocation3 [shape = 'u8[8192]{0}', space=vmem, size = 0x2000, scoped, tag = 'input window, operand 7, single buffered']
    #allocation4 [shape = 'u8[8192]{0}', space=vmem, size = 0x2000, scoped, tag = 'input window, operand 8, single buffered']
    #allocation5 [shape = 'u8[1024]{0}', space=vmem, size = 0x400, scoped, tag = 'output window, operand 0, single buffered']
    #allocation6 [shape = 's32[1]{0}', space=sflag, size = 0x4, scoped, tag = 'scoped memory for tpu_custom_call.1']
    #allocation7 [shape = 'u8[2048]{0}', space=vmem, size = 0x800, scoped, tag = 'output window, operand 1, single buffered']
    #allocation8 [shape = 'u8[2048]{0}', space=vmem, size = 0x800, scoped, tag = 'output window, operand 2, single buffered']
    %17 = vsyncpa [#allocation6], 0
    // Predicated region
    $region2: #{tpu_custom_call.1} parent=1 // pred_check
      _
    $region3: #{tpu_custom_call.1} parent=1 // pred_check_branch
      %19 = sbr.rel (0) target = $region5
    $region4: #{tpu_custom_call.1} parent=1 // pred_region
      _
    $region5: #{tpu_custom_call.1} parent=1 // pred_fallthru
      _
    // Predicated region
    $region6: #{tpu_custom_call.1} parent=1 // pred_check
      _
    $region7: #{tpu_custom_call.1} parent=1 // pred_check_branch
      %21 = sbr.rel (0) target = $region9
    $region8: #{tpu_custom_call.1} parent=1 // pred_region
      _
    $region9: #{tpu_custom_call.1} parent=1 // pred_fallthru
      _
    // Predicated region
    $region10: #{tpu_custom_call.1} parent=1 // pred_check
      _
    $region11: #{tpu_custom_call.1} parent=1 // pred_check_branch
      %23 = sbr.rel (0) target = $region13
    $region12: #{tpu_custom_call.1} parent=1 // pred_region
      _
    $region13: #{tpu_custom_call.1} parent=1 // pred_fallthru
      _
    // Predicated region
    $region14: #{tpu_custom_call.1} parent=1 // pred_check
      _
    $region15: #{tpu_custom_call.1} parent=1 // pred_check_branch
      %25 = sbr.rel (0) target = $region17
    $region16: #{tpu_custom_call.1} parent=1 // pred_region
      _
    $region17: #{tpu_custom_call.1} parent=1 // pred_fallthru
      _
    // Predicated region
    $region18: #{tpu_custom_call.1} parent=1 // pred_check
      _
    $region19: #{tpu_custom_call.1} parent=1 // pred_check_branch
      %27 = sbr.rel (0) target = $region21
    $region20: #{tpu_custom_call.1} parent=1 // pred_region
      _
    $region21: #{tpu_custom_call.1} parent=1 // pred_fallthru
      _
    // Predicated region
    $region22: #{tpu_custom_call.1} parent=1 // pred_check
      _
    $region23: #{tpu_custom_call.1} parent=1 // pred_check_branch
      %29 = sbr.rel (0) target = $region25
    $region24: #{tpu_custom_call.1} parent=1 // pred_region
      _
    $region25: #{tpu_custom_call.1} parent=1 // pred_fallthru
      _
    // Predicated region
    $region26: #{tpu_custom_call.1} parent=1 // pred_check
      _
    $region27: #{tpu_custom_call.1} parent=1 // pred_check_branch
      %31 = sbr.rel (0) target = $region29
    $region28: #{tpu_custom_call.1} parent=1 // pred_region
      _
    $region29: #{tpu_custom_call.1} parent=1 // pred_fallthru
      _
    // Predicated region
    $region30: #{tpu_custom_call.1} parent=1 // pred_check
      _
    $region31: #{tpu_custom_call.1} parent=1 // pred_check_branch
      %33 = sbr.rel (0) target = $region33
    $region32: #{tpu_custom_call.1} parent=1 // pred_region
      // Predicated region
      $region34: #{tpu_custom_call.1} parent=32 // pred_check
        _
      $region35: #{tpu_custom_call.1} parent=32 // pred_check_branch
        %35 = sbr.rel (0) target = $region37
      $region36: #{tpu_custom_call.1} parent=32 // pred_region
        // Predicated region
        $region38: #{tpu_custom_call.1} parent=36 // pred_check
          _
        $region39: #{tpu_custom_call.1} parent=36 // pred_check_branch
          %37 = sbr.rel target = $region41
        $region40: #{tpu_custom_call.1} parent=36 // pred_region
          // Predicated region
          $region53: #{tpu_custom_call.1} parent=40 // pred_check
            _
          $region54: #{tpu_custom_call.1} parent=40 // pred_check_branch
            %66 = sbr.rel (0) target = $region56
          $region55: #{tpu_custom_call.1} parent=40 // pred_region
            loop: start=0, step=1, limit=1
            $region57: #{tpu_custom_call.1} parent=55 // loop_pre_header
              _
            $region58: #{tpu_custom_call.1} parent=55 // loop_header
              %s68 = sphi 0, %s72
              %p69 = scmp.ge.s32.totalorder %s68, 1
              %s73 = sphi %s7, %s7
              %s74 = sphi [#allocation3], [#allocation3]
            $region59: #{tpu_custom_call.1} parent=55 // loop_header_branch
              %71 = sbr.rel (%p69) target = $region63
            $region60: #{tpu_custom_call.1} parent=55 // loop_body
              _
            $region61: #{tpu_custom_call.1} parent=55 // loop_footer
              %s72 = sadd.s32 1, %s68
            $region62: #{tpu_custom_call.1} parent=55 // loop_footer_branch
              %67 = sbr.rel target = $region58
            $region63: #{tpu_custom_call.1} parent=55 // loop_exit
              _
            loop: start=0, step=1, limit=1
            $region64: #{tpu_custom_call.1} parent=55 // loop_pre_header
              _
            $region65: #{tpu_custom_call.1} parent=55 // loop_header
              %s77 = sphi 0, %s81
              %p78 = scmp.ge.s32.totalorder %s77, 1
              %s82 = sphi %s7, %s7
              %s83 = sphi [#allocation3], [#allocation3]
            $region66: #{tpu_custom_call.1} parent=55 // loop_header_branch
              %80 = sbr.rel (%p78) target = $region70
            $region67: #{tpu_custom_call.1} parent=55 // loop_body
              %v84 = vld [vmem:[%s82] sm:$0x3]
              %85 = vst [vmem:[%s83] sm:$0x3] %v84
              %v86 = vld [vmem:[%s82 + $0x2] sm:$0x3]
              %87 = vst [vmem:[%s83 + $0x2] sm:$0x3] %v86
              %v88 = vld [vmem:[%s82 + $0x4] sm:$0x3]
              %89 = vst [vmem:[%s83 + $0x4] sm:$0x3] %v88
              %v90 = vld [vmem:[%s82 + $0x6] sm:$0x3]
              %91 = vst [vmem:[%s83 + $0x6] sm:$0x3] %v90
              %v92 = vld [vmem:[%s82 + $0x20] sm:$0x3]
              %93 = vst [vmem:[%s83 + $0x8] sm:$0x3] %v92
              %v94 = vld [vmem:[%s82 + $0x22] sm:$0x3]
              %95 = vst [vmem:[%s83 + $0xa] sm:$0x3] %v94
              %v96 = vld [vmem:[%s82 + $0x24] sm:$0x3]
              %97 = vst [vmem:[%s83 + $0xc] sm:$0x3] %v96
              %v98 = vld [vmem:[%s82 + $0x26] sm:$0x3]
              %99 = vst [vmem:[%s83 + $0xe] sm:$0x3] %v98
            $region68: #{tpu_custom_call.1} parent=55 // loop_footer
              %s81 = sadd.s32 1, %s77
            $region69: #{tpu_custom_call.1} parent=55 // loop_footer_branch
              %76 = sbr.rel target = $region65
            $region70: #{tpu_custom_call.1} parent=55 // loop_exit
              _
          $region56: #{tpu_custom_call.1} parent=40 // pred_fallthru
            _
        $region41: #{tpu_custom_call.1} parent=36 // pred_fallthru
          _
        // Predicated region
        $region42: #{tpu_custom_call.1} parent=36 // pred_check
          _
        $region43: #{tpu_custom_call.1} parent=36 // pred_check_branch
          %39 = sbr.rel (0) target = $region45
        $region44: #{tpu_custom_call.1} parent=36 // pred_region
          loop: start=0, step=1, limit=1
          $region46: #{tpu_custom_call.1} parent=44 // loop_pre_header
            _
          $region47: #{tpu_custom_call.1} parent=44 // loop_header
            %s42 = sphi 0, %s46
            %p43 = scmp.ge.s32.totalorder %s42, 1
            %s47 = sphi %s7, %s7
            %s48 = sphi [#allocation3], [#allocation3]
          $region48: #{tpu_custom_call.1} parent=44 // loop_header_branch
            %45 = sbr.rel (%p43) target = $region52
          $region49: #{tpu_custom_call.1} parent=44 // loop_body
            %v49 = vld [vmem:[%s47] sm:$0x3]
            %50 = vst [vmem:[%s48] sm:$0x3] %v49
            %v51 = vld [vmem:[%s47 + $0x2] sm:$0x3]
            %52 = vst [vmem:[%s48 + $0x2] sm:$0x3] %v51
            %v53 = vld [vmem:[%s47 + $0x4] sm:$0x3]
            %54 = vst [vmem:[%s48 + $0x4] sm:$0x3] %v53
            %v55 = vld [vmem:[%s47 + $0x6] sm:$0x3]
            %56 = vst [vmem:[%s48 + $0x6] sm:$0x3] %v55
            %v57 = vld [vmem:[%s47 + $0x20] sm:$0x3]
            %58 = vst [vmem:[%s48 + $0x8] sm:$0x3] %v57
            %v59 = vld [vmem:[%s47 + $0x22] sm:$0x3]
            %60 = vst [vmem:[%s48 + $0xa] sm:$0x3] %v59
            %v61 = vld [vmem:[%s47 + $0x24] sm:$0x3]
            %62 = vst [vmem:[%s48 + $0xc] sm:$0x3] %v61
            %v63 = vld [vmem:[%s47 + $0x26] sm:$0x3]
            %64 = vst [vmem:[%s48 + $0xe] sm:$0x3] %v63
          $region50: #{tpu_custom_call.1} parent=44 // loop_footer
            %s46 = sadd.s32 1, %s42
          $region51: #{tpu_custom_call.1} parent=44 // loop_footer_branch
            %41 = sbr.rel target = $region47
          $region52: #{tpu_custom_call.1} parent=44 // loop_exit
            _
        $region45: #{tpu_custom_call.1} parent=36 // pred_fallthru
          _
      $region37: #{tpu_custom_call.1} parent=32 // pred_fallthru
        _
      %100 = vnop
    $region33: #{tpu_custom_call.1} parent=1 // pred_fallthru
      _
    // Predicated region
    $region71: #{tpu_custom_call.1} parent=1 // pred_check
      _
    $region72: #{tpu_custom_call.1} parent=1 // pred_check_branch
      %102 = sbr.rel (0) target = $region74
    $region73: #{tpu_custom_call.1} parent=1 // pred_region
      // Predicated region
      $region75: #{tpu_custom_call.1} parent=73 // pred_check
        _
      $region76: #{tpu_custom_call.1} parent=73 // pred_check_branch
        %104 = sbr.rel (0) target = $region78
      $region77: #{tpu_custom_call.1} parent=73 // pred_region
        // Predicated region
        $region79: #{tpu_custom_call.1} parent=77 // pred_check
          _
        $region80: #{tpu_custom_call.1} parent=77 // pred_check_branch
          %106 = sbr.rel target = $region82
        $region81: #{tpu_custom_call.1} parent=77 // pred_region
          // Predicated region
          $region94: #{tpu_custom_call.1} parent=81 // pred_check
            _
          $region95: #{tpu_custom_call.1} parent=81 // pred_check_branch
            %135 = sbr.rel (0) target = $region97
          $region96: #{tpu_custom_call.1} parent=81 // pred_region
            loop: start=0, step=1, limit=1
            $region98: #{tpu_custom_call.1} parent=96 // loop_pre_header
              _
            $region99: #{tpu_custom_call.1} parent=96 // loop_header
              %s137 = sphi 0, %s141
              %p138 = scmp.ge.s32.totalorder %s137, 1
              %s142 = sphi %s8, %s8
              %s143 = sphi [#allocation4], [#allocation4]
            $region100: #{tpu_custom_call.1} parent=96 // loop_header_branch
              %140 = sbr.rel (%p138) target = $region104
            $region101: #{tpu_custom_call.1} parent=96 // loop_body
              _
            $region102: #{tpu_custom_call.1} parent=96 // loop_footer
              %s141 = sadd.s32 1, %s137
            $region103: #{tpu_custom_call.1} parent=96 // loop_footer_branch
              %136 = sbr.rel target = $region99
            $region104: #{tpu_custom_call.1} parent=96 // loop_exit
              _
            loop: start=0, step=1, limit=1
            $region105: #{tpu_custom_call.1} parent=96 // loop_pre_header
              _
            $region106: #{tpu_custom_call.1} parent=96 // loop_header
              %s146 = sphi 0, %s150
              %p147 = scmp.ge.s32.totalorder %s146, 1
              %s151 = sphi %s8, %s8
              %s152 = sphi [#allocation4], [#allocation4]
            $region107: #{tpu_custom_call.1} parent=96 // loop_header_branch
              %149 = sbr.rel (%p147) target = $region111
            $region108: #{tpu_custom_call.1} parent=96 // loop_body
              %v153 = vld [vmem:[%s151] sm:$0x3]
              %154 = vst [vmem:[%s152] sm:$0x3] %v153
              %v155 = vld [vmem:[%s151 + $0x2] sm:$0x3]
              %156 = vst [vmem:[%s152 + $0x2] sm:$0x3] %v155
              %v157 = vld [vmem:[%s151 + $0x4] sm:$0x3]
              %158 = vst [vmem:[%s152 + $0x4] sm:$0x3] %v157
              %v159 = vld [vmem:[%s151 + $0x6] sm:$0x3]
              %160 = vst [vmem:[%s152 + $0x6] sm:$0x3] %v159
              %v161 = vld [vmem:[%s151 + $0x20] sm:$0x3]
              %162 = vst [vmem:[%s152 + $0x8] sm:$0x3] %v161
              %v163 = vld [vmem:[%s151 + $0x22] sm:$0x3]
              %164 = vst [vmem:[%s152 + $0xa] sm:$0x3] %v163
              %v165 = vld [vmem:[%s151 + $0x24] sm:$0x3]
              %166 = vst [vmem:[%s152 + $0xc] sm:$0x3] %v165
              %v167 = vld [vmem:[%s151 + $0x26] sm:$0x3]
              %168 = vst [vmem:[%s152 + $0xe] sm:$0x3] %v167
            $region109: #{tpu_custom_call.1} parent=96 // loop_footer
              %s150 = sadd.s32 1, %s146
            $region110: #{tpu_custom_call.1} parent=96 // loop_footer_branch
              %145 = sbr.rel target = $region106
            $region111: #{tpu_custom_call.1} parent=96 // loop_exit
              _
          $region97: #{tpu_custom_call.1} parent=81 // pred_fallthru
            _
        $region82: #{tpu_custom_call.1} parent=77 // pred_fallthru
          _
        // Predicated region
        $region83: #{tpu_custom_call.1} parent=77 // pred_check
          _
        $region84: #{tpu_custom_call.1} parent=77 // pred_check_branch
          %108 = sbr.rel (0) target = $region86
        $region85: #{tpu_custom_call.1} parent=77 // pred_region
          loop: start=0, step=1, limit=1
          $region87: #{tpu_custom_call.1} parent=85 // loop_pre_header
            _
          $region88: #{tpu_custom_call.1} parent=85 // loop_header
            %s111 = sphi 0, %s115
            %p112 = scmp.ge.s32.totalorder %s111, 1
            %s116 = sphi %s8, %s8
            %s117 = sphi [#allocation4], [#allocation4]
          $region89: #{tpu_custom_call.1} parent=85 // loop_header_branch
            %114 = sbr.rel (%p112) target = $region93
          $region90: #{tpu_custom_call.1} parent=85 // loop_body
            %v118 = vld [vmem:[%s116] sm:$0x3]
            %119 = vst [vmem:[%s117] sm:$0x3] %v118
            %v120 = vld [vmem:[%s116 + $0x2] sm:$0x3]
            %121 = vst [vmem:[%s117 + $0x2] sm:$0x3] %v120
            %v122 = vld [vmem:[%s116 + $0x4] sm:$0x3]
            %123 = vst [vmem:[%s117 + $0x4] sm:$0x3] %v122
            %v124 = vld [vmem:[%s116 + $0x6] sm:$0x3]
            %125 = vst [vmem:[%s117 + $0x6] sm:$0x3] %v124
            %v126 = vld [vmem:[%s116 + $0x20] sm:$0x3]
            %127 = vst [vmem:[%s117 + $0x8] sm:$0x3] %v126
            %v128 = vld [vmem:[%s116 + $0x22] sm:$0x3]
            %129 = vst [vmem:[%s117 + $0xa] sm:$0x3] %v128
            %v130 = vld [vmem:[%s116 + $0x24] sm:$0x3]
            %131 = vst [vmem:[%s117 + $0xc] sm:$0x3] %v130
            %v132 = vld [vmem:[%s116 + $0x26] sm:$0x3]
            %133 = vst [vmem:[%s117 + $0xe] sm:$0x3] %v132
          $region91: #{tpu_custom_call.1} parent=85 // loop_footer
            %s115 = sadd.s32 1, %s111
          $region92: #{tpu_custom_call.1} parent=85 // loop_footer_branch
            %110 = sbr.rel target = $region88
          $region93: #{tpu_custom_call.1} parent=85 // loop_exit
            _
        $region86: #{tpu_custom_call.1} parent=77 // pred_fallthru
          _
      $region78: #{tpu_custom_call.1} parent=73 // pred_fallthru
        _
      %169 = vnop
    $region74: #{tpu_custom_call.1} parent=1 // pred_fallthru
      _
    // Predicated region
    $region112: #{tpu_custom_call.1} parent=1 // pred_check
      _
    $region113: #{tpu_custom_call.1} parent=1 // pred_check_branch
      %171 = sbr.rel (0) target = $region115
    $region114: #{tpu_custom_call.1} parent=1 // pred_region
      _
    $region115: #{tpu_custom_call.1} parent=1 // pred_fallthru
      _
    // Predicated region
    $region116: #{tpu_custom_call.1} parent=1 // pred_check
      _
    $region117: #{tpu_custom_call.1} parent=1 // pred_check_branch
      %173 = sbr.rel (0) target = $region119
    $region118: #{tpu_custom_call.1} parent=1 // pred_region
      _
    $region119: #{tpu_custom_call.1} parent=1 // pred_fallthru
      _
    %v174 = vld [vmem:[%s0] sm:$0x3]
    %v175 = vld [vmem:[%s1] sm:$0xff]
    %v176 = vld [vmem:[%s1 + $0x8] sm:$0xff]
    %v177 = vld [vmem:[%s1 + $0x10] sm:$0xff]
    %v178 = vld [vmem:[%s1 + $0x18] sm:$0xff]
    %vm179 = vcmask 261120
    %v181 = vsel %vm179, %v174, 0
    %183 = vmatprep.subr.mxu0 0.0
    %184 = vmatpush1.msra.mxu0 %v175
    %185 = vmatprep.subr.mxu0 0.0
    %186 = vmatpush1.msra.mxu0 %v176
    %187 = vmatprep.subr.mxu0 0.0
    %188 = vmatpush1.msra.mxu0 %v177
    %189 = vmatprep.subr.mxu0 0.0
    %190 = vmatpush1.msra.mxu0 %v178
    %191 = vmatprep.subr.mxu0 0.0
    %192 = vmatpush1.msra.mxu0 0.0
    %193 = vmatprep.subr.mxu0 0.0
    %194 = vmatpush1.msra.mxu0 0.0
    %195 = vmatprep.subr.mxu0 0.0
    %196 = vmatpush1.msra.mxu0 0.0
    %197 = vmatprep.subr.mxu0 0.0
    %198 = vmatpush1.msra.mxu0 0.0
    %199 = vmatprep.subr.mxu0 0.0
    %200 = vmatpush1.msra.mxu0 0.0
    %201 = vmatprep.subr.mxu0 0.0
    %202 = vmatpush1.msra.mxu0 0.0
    %203 = vmatprep.subr.mxu0 0.0
    %204 = vmatpush1.msra.mxu0 0.0
    %205 = vmatprep.subr.mxu0 0.0
    %206 = vmatpush1.msra.mxu0 0.0
    %207 = vmatprep.subr.mxu0 0.0
    %208 = vmatpush1.msra.mxu0 0.0
    %209 = vmatprep.subr.mxu0 0.0
    %210 = vmatpush1.msra.mxu0 0.0
    %211 = vmatprep.subr.mxu0 0.0
    %212 = vmatpush1.msra.mxu0 0.0
    %213 = vmatprep.subr.mxu0 0.0
    %214 = vmatpush1.msra.mxu0 0.0
    %215 = vmatprep.subr.mxu0 0.0
    %216 = vmatpush1.msra.mxu0 0.0
    %217 = vmatprep.subr.mxu0 0.0
    %218 = vmatpush1.msra.mxu0 0.0
    %219 = vmatprep.subr.mxu0 0.0
    %220 = vmatpush1.msra.mxu0 0.0
    %221 = vmatprep.subr.mxu0 0.0
    %222 = vmatpush1.msra.mxu0 0.0
    %223 = vmatprep.subr.mxu0 0.0
    %224 = vmatpush1.msra.mxu0 0.0
    %225 = vmatprep.subr.mxu0 0.0
    %226 = vmatpush1.msra.mxu0 0.0
    %227 = vmatprep.subr.mxu0 0.0
    %228 = vmatpush1.msra.mxu0 0.0
    %229 = vmatprep.subr.mxu0 0.0
    %230 = vmatpush1.msra.mxu0 0.0
    %231 = vmatprep.subr.mxu0 0.0
    %232 = vmatpush1.msra.mxu0 0.0
    %233 = vmatprep.subr.mxu0 0.0
    %234 = vmatpush1.msra.mxu0 0.0
    %235 = vmatprep.subr.mxu0 0.0
    %236 = vmatpush1.msra.mxu0 0.0
    %237 = vmatprep.subr.mxu0 0.0
    %238 = vmatpush1.msra.mxu0 0.0
    %239 = vmatprep.subr.mxu0 0.0
    %240 = vmatpush1.msra.mxu0 0.0
    %241 = vmatprep.subr.mxu0 0.0
    %242 = vmatpush1.msra.mxu0 0.0
    %243 = vmatprep.subr.mxu0 0.0
    %244 = vmatpush1.msra.mxu0 0.0
    %245 = vmatprep.subr.mxu0 0.0
    %246 = vmatpush1.msra.mxu0 0.0
    %247 = vmatprep.mubr.f32.mxu0 0.0
    %248 = vmatmul.mubr.f32.gmra.mrb[0].mxu0 %v181
    %v249 = vpop.f32.mrb[0].mxu0
    %v250 = vadd.f32 0.0, %v249
    %v251 = vpop.f32.mrb[0].mxu0
    %252 = vdwg.mxu0
    %v253 = vld [vmem:[%s2] sm:$0xff]
    %v254 = vld [vmem:[%s2 + $0x8] sm:$0xff]
    %v255 = vld [vmem:[%s2 + $0x10] sm:$0xff]
    %v256 = vld [vmem:[%s2 + $0x18] sm:$0xff]
    %257 = vmatprep.subr.mxu0 0.0
    %258 = vmatpush1.msra.mxu0 %v253
    %259 = vmatprep.subr.mxu0 0.0
    %260 = vmatpush1.msra.mxu0 %v254
    %261 = vmatprep.subr.mxu0 0.0
    %262 = vmatpush1.msra.mxu0 %v255
    %263 = vmatprep.subr.mxu0 0.0
    %264 = vmatpush1.msra.mxu0 %v256
    %265 = vmatprep.subr.mxu0 0.0
    %266 = vmatpush1.msra.mxu0 0.0
    %267 = vmatprep.subr.mxu0 0.0
    %268 = vmatpush1.msra.mxu0 0.0
    %269 = vmatprep.subr.mxu0 0.0
    %270 = vmatpush1.msra.mxu0 0.0
    %271 = vmatprep.subr.mxu0 0.0
    %272 = vmatpush1.msra.mxu0 0.0
    %273 = vmatprep.subr.mxu0 0.0
    %274 = vmatpush1.msra.mxu0 0.0
    %275 = vmatprep.subr.mxu0 0.0
    %276 = vmatpush1.msra.mxu0 0.0
    %277 = vmatprep.subr.mxu0 0.0
    %278 = vmatpush1.msra.mxu0 0.0
    %279 = vmatprep.subr.mxu0 0.0
    %280 = vmatpush1.msra.mxu0 0.0
    %281 = vmatprep.subr.mxu0 0.0
    %282 = vmatpush1.msra.mxu0 0.0
    %283 = vmatprep.subr.mxu0 0.0
    %284 = vmatpush1.msra.mxu0 0.0
    %285 = vmatprep.subr.mxu0 0.0
    %286 = vmatpush1.msra.mxu0 0.0
    %287 = vmatprep.subr.mxu0 0.0
    %288 = vmatpush1.msra.mxu0 0.0
    %289 = vmatprep.subr.mxu0 0.0
    %290 = vmatpush1.msra.mxu0 0.0
    %291 = vmatprep.subr.mxu0 0.0
    %292 = vmatpush1.msra.mxu0 0.0
    %293 = vmatprep.subr.mxu0 0.0
    %294 = vmatpush1.msra.mxu0 0.0
    %295 = vmatprep.subr.mxu0 0.0
    %296 = vmatpush1.msra.mxu0 0.0
    %297 = vmatprep.subr.mxu0 0.0
    %298 = vmatpush1.msra.mxu0 0.0
    %299 = vmatprep.subr.mxu0 0.0
    %300 = vmatpush1.msra.mxu0 0.0
    %301 = vmatprep.subr.mxu0 0.0
    %302 = vmatpush1.msra.mxu0 0.0
    %303 = vmatprep.subr.mxu0 0.0
    %304 = vmatpush1.msra.mxu0 0.0
    %305 = vmatprep.subr.mxu0 0.0
    %306 = vmatpush1.msra.mxu0 0.0
    %307 = vmatprep.subr.mxu0 0.0
    %308 = vmatpush1.msra.mxu0 0.0
    %309 = vmatprep.subr.mxu0 0.0
    %310 = vmatpush1.msra.mxu0 0.0
    %311 = vmatprep.subr.mxu0 0.0
    %312 = vmatpush1.msra.mxu0 0.0
    %313 = vmatprep.subr.mxu0 0.0
    %314 = vmatpush1.msra.mxu0 0.0
    %315 = vmatprep.subr.mxu0 0.0
    %316 = vmatpush1.msra.mxu0 0.0
    %317 = vmatprep.subr.mxu0 0.0
    %318 = vmatpush1.msra.mxu0 0.0
    %319 = vmatprep.subr.mxu0 0.0
    %320 = vmatpush1.msra.mxu0 0.0
    %321 = vmatprep.mubr.f32.mxu0 0.0
    %322 = vmatmul.mubr.f32.gmra.mrb[0].mxu0 %v181
    %v323 = vpop.f32.mrb[0].mxu0
    %v324 = vadd.f32 0.0, %v323
    %v325 = vpop.f32.mrb[0].mxu0
    %326 = vdwg.mxu0
    %v327 = vld [vmem:[%s3] sm:$0xff]
    %v328 = vld [vmem:[%s3 + $0x8] sm:$0xff]
    %v329 = vld [vmem:[%s3 + $0x10] sm:$0xff]
    %v330 = vld [vmem:[%s3 + $0x18] sm:$0xff]
    %331 = vmatprep.subr.mxu0 0.0
    %332 = vmatpush1.msra.mxu0 %v327
    %333 = vmatprep.subr.mxu0 0.0
    %334 = vmatpush1.msra.mxu0 %v328
    %335 = vmatprep.subr.mxu0 0.0
    %336 = vmatpush1.msra.mxu0 %v329
    %337 = vmatprep.subr.mxu0 0.0
    %338 = vmatpush1.msra.mxu0 %v330
    %339 = vmatprep.subr.mxu0 0.0
    %340 = vmatpush1.msra.mxu0 0.0
    %341 = vmatprep.subr.mxu0 0.0
    %342 = vmatpush1.msra.mxu0 0.0
    %343 = vmatprep.subr.mxu0 0.0
    %344 = vmatpush1.msra.mxu0 0.0
    %345 = vmatprep.subr.mxu0 0.0
    %346 = vmatpush1.msra.mxu0 0.0
    %347 = vmatprep.subr.mxu0 0.0
    %348 = vmatpush1.msra.mxu0 0.0
    %349 = vmatprep.subr.mxu0 0.0
    %350 = vmatpush1.msra.mxu0 0.0
    %351 = vmatprep.subr.mxu0 0.0
    %352 = vmatpush1.msra.mxu0 0.0
    %353 = vmatprep.subr.mxu0 0.0
    %354 = vmatpush1.msra.mxu0 0.0
    %355 = vmatprep.subr.mxu0 0.0
    %356 = vmatpush1.msra.mxu0 0.0
    %357 = vmatprep.subr.mxu0 0.0
    %358 = vmatpush1.msra.mxu0 0.0
    %359 = vmatprep.subr.mxu0 0.0
    %360 = vmatpush1.msra.mxu0 0.0
    %361 = vmatprep.subr.mxu0 0.0
    %362 = vmatpush1.msra.mxu0 0.0
    %363 = vmatprep.subr.mxu0 0.0
    %364 = vmatpush1.msra.mxu0 0.0
    %365 = vmatprep.subr.mxu0 0.0
    %366 = vmatpush1.msra.mxu0 0.0
    %367 = vmatprep.subr.mxu0 0.0
    %368 = vmatpush1.msra.mxu0 0.0
    %369 = vmatprep.subr.mxu0 0.0
    %370 = vmatpush1.msra.mxu0 0.0
    %371 = vmatprep.subr.mxu0 0.0
    %372 = vmatpush1.msra.mxu0 0.0
    %373 = vmatprep.subr.mxu0 0.0
    %374 = vmatpush1.msra.mxu0 0.0
    %375 = vmatprep.subr.mxu0 0.0
    %376 = vmatpush1.msra.mxu0 0.0
    %377 = vmatprep.subr.mxu0 0.0
    %378 = vmatpush1.msra.mxu0 0.0
    %379 = vmatprep.subr.mxu0 0.0
    %380 = vmatpush1.msra.mxu0 0.0
    %381 = vmatprep.subr.mxu0 0.0
    %382 = vmatpush1.msra.mxu0 0.0
    %383 = vmatprep.subr.mxu0 0.0
    %384 = vmatpush1.msra.mxu0 0.0
    %385 = vmatprep.subr.mxu0 0.0
    %386 = vmatpush1.msra.mxu0 0.0
    %387 = vmatprep.subr.mxu0 0.0
    %388 = vmatpush1.msra.mxu0 0.0
    %389 = vmatprep.subr.mxu0 0.0
    %390 = vmatpush1.msra.mxu0 0.0
    %391 = vmatprep.subr.mxu0 0.0
    %392 = vmatpush1.msra.mxu0 0.0
    %393 = vmatprep.subr.mxu0 0.0
    %394 = vmatpush1.msra.mxu0 0.0
    %395 = vmatprep.mubr.f32.mxu0 0.0
    %396 = vmatmul.mubr.f32.gmra.mrb[0].mxu0 %v181
    %v397 = vpop.f32.mrb[0].mxu0
    %v398 = vadd.f32 0.0, %v397
    %v399 = vpop.f32.mrb[0].mxu0
    %400 = vdwg.mxu0
    %v401 = vld [vmem:[%s5] sm:$0x1]
    %v403 = vlaneseq
    %v404 = vshrl.u32 %v403, 7
    %v405 = vsub.s32 0, %v404
    %v406 = vrot.slane %v401, %v405
    %vm408 = vcmask 1040384
    %v409 = vsel %vm408, %v401, %v406
    %v410 = vld [vmem:[%s6] sm:$0x1]
    %v412 = vlaneseq
    %v413 = vshrl.u32 %v412, 7
    %v414 = vsub.s32 0, %v413
    %v415 = vrot.slane %v410, %v414
    %v417 = vsel %vm408, %v410, %v415
    %419 = vrot.lane.b32.xlu0 %v409, 8
    %v420 = vpop.permute.xlu0 %419
    %422 = vrot.lane.b32.xlu0 %v409, 16
    %v423 = vpop.permute.xlu0 %422
    %425 = vrot.lane.b32.xlu0 %v409, 24
    %v426 = vpop.permute.xlu0 %425
    %vm428 = vcmask 64512
    %v429 = vsel %vm428, %v409, %v420
    %vm430 = vcmask 130048
    %v431 = vsel %vm430, %v429, %v423
    %vm432 = vcmask 195584
    %v433 = vsel %vm432, %v431, %v426
    %435 = vrot.lane.b32.xlu0 %v417, 8
    %v436 = vpop.permute.xlu0 %435
    %438 = vrot.lane.b32.xlu0 %v417, 16
    %v439 = vpop.permute.xlu0 %438
    %441 = vrot.lane.b32.xlu0 %v417, 24
    %v442 = vpop.permute.xlu0 %441
    %v444 = vsel %vm428, %v417, %v436
    %v445 = vsel %vm430, %v444, %v439
    %v446 = vsel %vm432, %v445, %v442
    %v447 = vlaneseq
    %v448 = vand.u32 %v447, 127
    %v449 = vand.u32 %v448, 1
    %vm450 = vcmp.eq.s32.totalorder %v449, 0
    %452 = vrot.lane.b32.xlu0 %v250, 127
    %v453 = vpop.permute.xlu0 %452
    %455 = vrot.lane.b32.xlu0 %v250, 31
    %v456 = vpop.permute.xlu0 %455
    %vm458 = vcmask 252928
    %v459 = vsel %vm458, %v453, %v456
    %v460 = vsub.f32 0.0, %v459
    %461 = vrot.lane.b32.xlu0 %v250, 97
    %v462 = vpop.permute.xlu0 %461
    %464 = vrot.lane.b32.xlu0 %v250, 1
    %v465 = vpop.permute.xlu0 %464
    %vm467 = vcmask 7168
    %v468 = vsel %vm467, %v462, %v465
    %v469 = vsel %vm450, %v460, %v468
    %v470 = vmul.f32 %v250, %v433
    %v471 = vmul.f32 %v469, %v446
    %v472 = vadd.f32 %v470, %v471
    %v473 = vmul.f32 %v472, 0.35355338
    %475 = vrot.lane.b32.xlu0 %v324, 127
    %v476 = vpop.permute.xlu0 %475
    %478 = vrot.lane.b32.xlu0 %v324, 15
    %v479 = vpop.permute.xlu0 %478
    %vm481 = vcmask 121856
    %v482 = vsel %vm481, %v476, %v479
    %v483 = vsub.f32 0.0, %v482
    %484 = vrot.lane.b32.xlu0 %v324, 113
    %v485 = vpop.permute.xlu0 %484
    %487 = vrot.lane.b32.xlu0 %v324, 1
    %v488 = vpop.permute.xlu0 %487
    %v490 = vsel %vm467, %v485, %v488
    %v491 = vsel %vm450, %v483, %v490
    %v492 = vmul.f32 %v324, %v429
    %v493 = vmul.f32 %v491, %v444
    %v494 = vadd.f32 %v492, %v493
    %v497 = vunpack.c.l.s4 1966171168
    %v498 = vunpack.c.0.s8 %v497
    %v499 = vlaneseq
    %v500 = vshrl.u32 %v499, 7
    %v501 = vsub.s32 %v498, %v500
    %v502 = vrot.slane %v494, %v501
    %v503 = vcombine.high %v502, %v502
    %v505 = vunpack.c.l.s4 1966171168
    %v506 = vunpack.c.0.s8 %v505
    %v507 = vlaneseq
    %v508 = vshrl.u32 %v507, 7
    %v509 = vsub.s32 %v506, %v508
    %v510 = vrot.slane %v502, %v509
    %v512 = vunpack.c.l.s4 1966171168
    %v513 = vunpack.c.0.s8 %v512
    %v514 = vlaneseq
    %v515 = vshrl.u32 %v514, 7
    %v516 = vsub.s32 %v513, %v515
    %v517 = vrot.slane %v503, %v516
    %v520 = vunpack.c.l.s4 1966171168
    %v521 = vunpack.c.0.s8 %v520
    %v522 = vlaneseq
    %v523 = vshrl.u32 %v522, 7
    %v524 = vsub.s32 %v521, %v523
    %v525 = vrot.slane %v398, %v524
    %v526 = vcombine.high %v525, %v525
    %v528 = vunpack.c.l.s4 1966171168
    %v529 = vunpack.c.0.s8 %v528
    %v530 = vlaneseq
    %v531 = vshrl.u32 %v530, 7
    %v532 = vsub.s32 %v529, %v531
    %v533 = vrot.slane %v525, %v532
    %v535 = vunpack.c.l.s4 1966171168
    %v536 = vunpack.c.0.s8 %v535
    %v537 = vlaneseq
    %v538 = vshrl.u32 %v537, 7
    %v539 = vsub.s32 %v536, %v538
    %v540 = vrot.slane %v526, %v539
    %vm543 = vcmask 57344
    %544 = vst.msk [vmem:[#allocation7] sm:$0x1] %vm543, %v510
    %545 = vst.msk [vmem:[#allocation7 + $0x2] sm:$0x1] %vm543, %v517
    %548 = vst.msk [vmem:[#allocation8] sm:$0x1] %vm543, %v533
    %549 = vst.msk [vmem:[#allocation8 + $0x2] sm:$0x1] %vm543, %v540
    %v550 = vld [vmem:[#allocation3] sm:$0x1]
    %v551 = vld [vmem:[#allocation3 + $0x2] sm:$0x1]
    %v552 = vld [vmem:[#allocation3 + $0x4] sm:$0x1]
    %v553 = vld [vmem:[#allocation3 + $0x6] sm:$0x1]
    %v554 = vld [vmem:[#allocation3 + $0x8] sm:$0x1]
    %v555 = vld [vmem:[#allocation3 + $0xa] sm:$0x1]
    %v556 = vld [vmem:[#allocation3 + $0xc] sm:$0x1]
    %v557 = vld [vmem:[#allocation3 + $0xe] sm:$0x1]
    %v558 = vld [vmem:[#allocation4] sm:$0x1]
    %v559 = vld [vmem:[#allocation4 + $0x2] sm:$0x1]
    %v560 = vld [vmem:[#allocation4 + $0x4] sm:$0x1]
    %v561 = vld [vmem:[#allocation4 + $0x6] sm:$0x1]
    %v562 = vld [vmem:[#allocation4 + $0x8] sm:$0x1]
    %v563 = vld [vmem:[#allocation4 + $0xa] sm:$0x1]
    %v564 = vld [vmem:[#allocation4 + $0xc] sm:$0x1]
    %v565 = vld [vmem:[#allocation4 + $0xe] sm:$0x1]
    %v568 = vunpack.c.l.s4 1966171168
    %v569 = vunpack.c.0.s8 %v568
    %v570 = vlaneseq
    %v571 = vshrl.u32 %v570, 7
    %v572 = vsub.s32 %v569, %v571
    %v573 = vrot.slane %v473, %v572
    %v574 = vcombine.high %v573, %v573
    %v576 = vunpack.c.l.s4 1966171168
    %v577 = vunpack.c.0.s8 %v576
    %v578 = vlaneseq
    %v579 = vshrl.u32 %v578, 7
    %v580 = vsub.s32 %v577, %v579
    %v581 = vrot.slane %v573, %v580
    %v583 = vunpack.c.l.s4 1966171168
    %v584 = vunpack.c.0.s8 %v583
    %v585 = vlaneseq
    %v586 = vshrl.u32 %v585, 7
    %v587 = vsub.s32 %v584, %v586
    %v588 = vrot.slane %v574, %v587
    %v591 = vlaneseq
    %v592 = vshrl.u32 %v591, 7
    %v593 = vsub.s32 0, %v592
    %v594 = vrot.slane %v581, %v593
    %v595 = vlaneseq
    %v596 = vshrl.u32 %v595, 7
    %v597 = vsub.s32 0, %v596
    %v598 = vrot.slane %v588, %v597
    %599 = vrot.lane.b32.xlu0 %v594, 120
    %v600 = vpop.permute.xlu0 %599
    %601 = vrot.lane.b32.xlu0 %v598, 120
    %v602 = vpop.permute.xlu0 %601
    %v605 = vsel %vm408, %v581, %v600
    %v606 = vsel %vm408, %v588, %v602
    %v611 = vrot.slane %v551, 7
    %vm612 = vcmask 1041409
    %v613 = vsel %vm612, %v611, %v550
    %v614 = vrot.slane %v552, 6
    %vm615 = vcmask 1042434
    %v616 = vsel %vm615, %v614, %v613
    %v617 = vrot.slane %v553, 5
    %vm618 = vcmask 1043459
    %v619 = vsel %vm618, %v617, %v616
    %v621 = vsel %vm428, %v605, 0
    %v623 = vsel %vm428, %v619, 0
    %625 = vmatprep.subr.mxu0 0.0
    %626 = vmatpush1.xpose.msra.mxu0 %v623
    %627 = vmatprep.subr.mxu0 0.0
    %628 = vmatpush1.xpose.msra.mxu0 0.0
    %629 = vmatprep.subr.mxu0 0.0
    %630 = vmatpush1.xpose.msra.mxu0 0.0
    %631 = vmatprep.subr.mxu0 0.0
    %632 = vmatpush1.xpose.msra.mxu0 0.0
    %633 = vmatprep.subr.mxu0 0.0
    %634 = vmatpush1.xpose.msra.mxu0 0.0
    %635 = vmatprep.subr.mxu0 0.0
    %636 = vmatpush1.xpose.msra.mxu0 0.0
    %637 = vmatprep.subr.mxu0 0.0
    %638 = vmatpush1.xpose.msra.mxu0 0.0
    %639 = vmatprep.subr.mxu0 0.0
    %640 = vmatpush1.xpose.msra.mxu0 0.0
    %641 = vmatprep.subr.mxu0 0.0
    %642 = vmatpush1.xpose.msra.mxu0 0.0
    %643 = vmatprep.subr.mxu0 0.0
    %644 = vmatpush1.xpose.msra.mxu0 0.0
    %645 = vmatprep.subr.mxu0 0.0
    %646 = vmatpush1.xpose.msra.mxu0 0.0
    %647 = vmatprep.subr.mxu0 0.0
    %648 = vmatpush1.xpose.msra.mxu0 0.0
    %649 = vmatprep.subr.mxu0 0.0
    %650 = vmatpush1.xpose.msra.mxu0 0.0
    %651 = vmatprep.subr.mxu0 0.0
    %652 = vmatpush1.xpose.msra.mxu0 0.0
    %653 = vmatprep.subr.mxu0 0.0
    %654 = vmatpush1.xpose.msra.mxu0 0.0
    %655 = vmatprep.subr.mxu0 0.0
    %656 = vmatpush1.xpose.msra.mxu0 0.0
    %657 = vmatprep.subr.mxu0 0.0
    %658 = vmatpush1.xpose.msra.mxu0 0.0
    %659 = vmatprep.subr.mxu0 0.0
    %660 = vmatpush1.xpose.msra.mxu0 0.0
    %661 = vmatprep.subr.mxu0 0.0
    %662 = vmatpush1.xpose.msra.mxu0 0.0
    %663 = vmatprep.subr.mxu0 0.0
    %664 = vmatpush1.xpose.msra.mxu0 0.0
    %665 = vmatprep.subr.mxu0 0.0
    %666 = vmatpush1.xpose.msra.mxu0 0.0
    %667 = vmatprep.subr.mxu0 0.0
    %668 = vmatpush1.xpose.msra.mxu0 0.0
    %669 = vmatprep.subr.mxu0 0.0
    %670 = vmatpush1.xpose.msra.mxu0 0.0
    %671 = vmatprep.subr.mxu0 0.0
    %672 = vmatpush1.xpose.msra.mxu0 0.0
    %673 = vmatprep.subr.mxu0 0.0
    %674 = vmatpush1.xpose.msra.mxu0 0.0
    %675 = vmatprep.subr.mxu0 0.0
    %676 = vmatpush1.xpose.msra.mxu0 0.0
    %677 = vmatprep.subr.mxu0 0.0
    %678 = vmatpush1.xpose.msra.mxu0 0.0
    %679 = vmatprep.subr.mxu0 0.0
    %680 = vmatpush1.xpose.msra.mxu0 0.0
    %681 = vmatprep.subr.mxu0 0.0
    %682 = vmatpush1.xpose.msra.mxu0 0.0
    %683 = vmatprep.subr.mxu0 0.0
    %684 = vmatpush1.xpose.msra.mxu0 0.0
    %685 = vmatprep.subr.mxu0 0.0
    %686 = vmatpush1.xpose.msra.mxu0 0.0
    %687 = vmatprep.subr.mxu0 0.0
    %688 = vmatpush1.xpose.msra.mxu0 0.0
    %689 = vmatprep.mubr.f32.mxu0 0.0
    %690 = vmatmul.mubr.f32.gmra.mrb[0].mxu0 %v621
    %v691 = vpop.f32.mrb[0].mxu0
    %v692 = vadd.f32 0.0, %v691
    %v693 = vpop.f32.mrb[0].mxu0
    %694 = vdwg.mxu0
    %v699 = vrot.slane %v555, 7
    %v700 = vsel %vm612, %v699, %v554
    %v701 = vrot.slane %v556, 6
    %v702 = vsel %vm615, %v701, %v700
    %v703 = vrot.slane %v557, 5
    %v704 = vsel %vm618, %v703, %v702
    %v706 = vsel %vm428, %v606, 0
    %v708 = vsel %vm428, %v704, 0
    %710 = vmatprep.subr.mxu0 0.0
    %711 = vmatpush1.xpose.msra.mxu0 %v708
    %712 = vmatprep.subr.mxu0 0.0
    %713 = vmatpush1.xpose.msra.mxu0 0.0
    %714 = vmatprep.subr.mxu0 0.0
    %715 = vmatpush1.xpose.msra.mxu0 0.0
    %716 = vmatprep.subr.mxu0 0.0
    %717 = vmatpush1.xpose.msra.mxu0 0.0
    %718 = vmatprep.subr.mxu0 0.0
    %719 = vmatpush1.xpose.msra.mxu0 0.0
    %720 = vmatprep.subr.mxu0 0.0
    %721 = vmatpush1.xpose.msra.mxu0 0.0
    %722 = vmatprep.subr.mxu0 0.0
    %723 = vmatpush1.xpose.msra.mxu0 0.0
    %724 = vmatprep.subr.mxu0 0.0
    %725 = vmatpush1.xpose.msra.mxu0 0.0
    %726 = vmatprep.subr.mxu0 0.0
    %727 = vmatpush1.xpose.msra.mxu0 0.0
    %728 = vmatprep.subr.mxu0 0.0
    %729 = vmatpush1.xpose.msra.mxu0 0.0
    %730 = vmatprep.subr.mxu0 0.0
    %731 = vmatpush1.xpose.msra.mxu0 0.0
    %732 = vmatprep.subr.mxu0 0.0
    %733 = vmatpush1.xpose.msra.mxu0 0.0
    %734 = vmatprep.subr.mxu0 0.0
    %735 = vmatpush1.xpose.msra.mxu0 0.0
    %736 = vmatprep.subr.mxu0 0.0
    %737 = vmatpush1.xpose.msra.mxu0 0.0
    %738 = vmatprep.subr.mxu0 0.0
    %739 = vmatpush1.xpose.msra.mxu0 0.0
    %740 = vmatprep.subr.mxu0 0.0
    %741 = vmatpush1.xpose.msra.mxu0 0.0
    %742 = vmatprep.subr.mxu0 0.0
    %743 = vmatpush1.xpose.msra.mxu0 0.0
    %744 = vmatprep.subr.mxu0 0.0
    %745 = vmatpush1.xpose.msra.mxu0 0.0
    %746 = vmatprep.subr.mxu0 0.0
    %747 = vmatpush1.xpose.msra.mxu0 0.0
    %748 = vmatprep.subr.mxu0 0.0
    %749 = vmatpush1.xpose.msra.mxu0 0.0
    %750 = vmatprep.subr.mxu0 0.0
    %751 = vmatpush1.xpose.msra.mxu0 0.0
    %752 = vmatprep.subr.mxu0 0.0
    %753 = vmatpush1.xpose.msra.mxu0 0.0
    %754 = vmatprep.subr.mxu0 0.0
    %755 = vmatpush1.xpose.msra.mxu0 0.0
    %756 = vmatprep.subr.mxu0 0.0
    %757 = vmatpush1.xpose.msra.mxu0 0.0
    %758 = vmatprep.subr.mxu0 0.0
    %759 = vmatpush1.xpose.msra.mxu0 0.0
    %760 = vmatprep.subr.mxu0 0.0
    %761 = vmatpush1.xpose.msra.mxu0 0.0
    %762 = vmatprep.subr.mxu0 0.0
    %763 = vmatpush1.xpose.msra.mxu0 0.0
    %764 = vmatprep.subr.mxu0 0.0
    %765 = vmatpush1.xpose.msra.mxu0 0.0
    %766 = vmatprep.subr.mxu0 0.0
    %767 = vmatpush1.xpose.msra.mxu0 0.0
    %768 = vmatprep.subr.mxu0 0.0
    %769 = vmatpush1.xpose.msra.mxu0 0.0
    %770 = vmatprep.subr.mxu0 0.0
    %771 = vmatpush1.xpose.msra.mxu0 0.0
    %772 = vmatprep.subr.mxu0 0.0
    %773 = vmatpush1.xpose.msra.mxu0 0.0
    %774 = vmatprep.mubr.f32.mxu0 0.0
    %775 = vmatmul.mubr.f32.gmra.mrb[0].mxu0 %v706
    %v776 = vpop.f32.mrb[0].mxu0
    %v777 = vadd.f32 0.0, %v776
    %v778 = vpop.f32.mrb[0].mxu0
    %779 = vdwg.mxu0
    %v780 = vlaneseq
    %v781 = vshrl.u32 %v780, 7
    %v782 = vsub.s32 0, %v781
    %v783 = vrot.slane %v510, %v782
    %v785 = vmul.f32 %v605, %v783
    %vm786 = vcmask 58368
    %v787 = vsel %vm786, %v785, 0.0
    %788 = vadd.xlane.f32.xlu0 %v787
    %v789 = vpop.xlane.xlu0 %788
    %v790 = vlaneseq
    %v791 = vshrl.u32 %v790, 7
    %v792 = vsub.s32 0, %v791
    %v793 = vrot.slane %v517, %v792
    %v795 = vmul.f32 %v606, %v793
    %v796 = vsel %vm786, %v795, 0.0
    %797 = vadd.xlane.f32.xlu0 %v796
    %v798 = vpop.xlane.xlu0 %797
    %vm799 = vcmask 25600
    %v800 = vsel %vm799, %v692, -inf
    %801 = vmax.xlane.f32.xlu0 %v800
    %v802 = vpop.xlane.xlu0 %801
    %v803 = vsel %vm799, %v777, -inf
    %804 = vmax.xlane.f32.xlu0 %v803
    %v805 = vpop.xlane.xlu0 %804
    %v806 = vmax.f32 %v802, %v789
    %v807 = vmax.f32 %v805, %v798
    %809 = vset.pattern.permute.xlu0 0
    %810 = vperm.xlu0 %809, %v806
    %v811 = vpop.permute.xlu0 %810
    %814 = vset.pattern.permute.xlu0 0
    %815 = vperm.xlu0 %814, %v807
    %v816 = vpop.permute.xlu0 %815
    %v818 = vsub.f32 %v692, %v811
    %v819 = vsub.f32 %v777, %v816
    %v820 = vmul.f32 %v818, 1.442695
    %v821 = vpow.pop %v820
    %v822 = vmul.f32 %v819, 1.442695
    %v823 = vpow.pop %v822
    %v824 = vsub.f32 %v789, %v806
    %v825 = vsub.f32 %v798, %v807
    %v826 = vmul.f32 %v824, 1.442695
    %v827 = vpow.pop %v826
    %v828 = vmul.f32 %v825, 1.442695
    %v829 = vpow.pop %v828
    %v830 = vsel %vm799, %v821, 0.0
    %831 = vadd.xlane.f32.xlu0 %v830
    %v832 = vpop.xlane.xlu0 %831
    %v833 = vsel %vm799, %v823, 0.0
    %834 = vadd.xlane.f32.xlu0 %v833
    %v835 = vpop.xlane.xlu0 %834
    %v836 = vadd.f32 %v827, 0.0
    %v837 = vadd.f32 %v829, 0.0
    %v838 = vadd.f32 %v832, %v836
    %v839 = vadd.f32 %v835, %v837
    %v840 = vrcp.pop %v838
    %v841 = vrcp.pop %v839
    %v843 = vsel %vm467, %v827, 0
    %v845 = vsel %vm408, %v533, 0
    %847 = vmatprep.subr.mxu0 0.0
    %848 = vmatpush1.msra.mxu0 %v845
    %849 = vmatprep.subr.mxu0 0.0
    %850 = vmatpush1.msra.mxu0 0.0
    %851 = vmatprep.subr.mxu0 0.0
    %852 = vmatpush1.msra.mxu0 0.0
    %853 = vmatprep.subr.mxu0 0.0
    %854 = vmatpush1.msra.mxu0 0.0
    %855 = vmatprep.subr.mxu0 0.0
    %856 = vmatpush1.msra.mxu0 0.0
    %857 = vmatprep.subr.mxu0 0.0
    %858 = vmatpush1.msra.mxu0 0.0
    %859 = vmatprep.subr.mxu0 0.0
    %860 = vmatpush1.msra.mxu0 0.0
    %861 = vmatprep.subr.mxu0 0.0
    %862 = vmatpush1.msra.mxu0 0.0
    %863 = vmatprep.subr.mxu0 0.0
    %864 = vmatpush1.msra.mxu0 0.0
    %865 = vmatprep.subr.mxu0 0.0
    %866 = vmatpush1.msra.mxu0 0.0
    %867 = vmatprep.subr.mxu0 0.0
    %868 = vmatpush1.msra.mxu0 0.0
    %869 = vmatprep.subr.mxu0 0.0
    %870 = vmatpush1.msra.mxu0 0.0
    %871 = vmatprep.subr.mxu0 0.0
    %872 = vmatpush1.msra.mxu0 0.0
    %873 = vmatprep.subr.mxu0 0.0
    %874 = vmatpush1.msra.mxu0 0.0
    %875 = vmatprep.subr.mxu0 0.0
    %876 = vmatpush1.msra.mxu0 0.0
    %877 = vmatprep.subr.mxu0 0.0
    %878 = vmatpush1.msra.mxu0 0.0
    %879 = vmatprep.subr.mxu0 0.0
    %880 = vmatpush1.msra.mxu0 0.0
    %881 = vmatprep.subr.mxu0 0.0
    %882 = vmatpush1.msra.mxu0 0.0
    %883 = vmatprep.subr.mxu0 0.0
    %884 = vmatpush1.msra.mxu0 0.0
    %885 = vmatprep.subr.mxu0 0.0
    %886 = vmatpush1.msra.mxu0 0.0
    %887 = vmatprep.subr.mxu0 0.0
    %888 = vmatpush1.msra.mxu0 0.0
    %889 = vmatprep.subr.mxu0 0.0
    %890 = vmatpush1.msra.mxu0 0.0
    %891 = vmatprep.subr.mxu0 0.0
    %892 = vmatpush1.msra.mxu0 0.0
    %893 = vmatprep.subr.mxu0 0.0
    %894 = vmatpush1.msra.mxu0 0.0
    %895 = vmatprep.subr.mxu0 0.0
    %896 = vmatpush1.msra.mxu0 0.0
    %897 = vmatprep.subr.mxu0 0.0
    %898 = vmatpush1.msra.mxu0 0.0
    %899 = vmatprep.subr.mxu0 0.0
    %900 = vmatpush1.msra.mxu0 0.0
    %901 = vmatprep.subr.mxu0 0.0
    %902 = vmatpush1.msra.mxu0 0.0
    %903 = vmatprep.subr.mxu0 0.0
    %904 = vmatpush1.msra.mxu0 0.0
    %905 = vmatprep.subr.mxu0 0.0
    %906 = vmatpush1.msra.mxu0 0.0
    %907 = vmatprep.subr.mxu0 0.0
    %908 = vmatpush1.msra.mxu0 0.0
    %909 = vmatprep.subr.mxu0 0.0
    %910 = vmatpush1.msra.mxu0 0.0
    %911 = vmatprep.mubr.f32.mxu0 0.0
    %912 = vmatmul.mubr.f32.gmra.mrb[0].mxu0 %v843
    %v913 = vpop.f32.mrb[0].mxu0
    %v914 = vadd.f32 0.0, %v913
    %v915 = vpop.f32.mrb[0].mxu0
    %916 = vdwg.mxu0
    %v918 = vsel %vm467, %v829, 0
    %v920 = vsel %vm408, %v540, 0
    %922 = vmatprep.subr.mxu0 0.0
    %923 = vmatpush1.msra.mxu0 %v920
    %924 = vmatprep.subr.mxu0 0.0
    %925 = vmatpush1.msra.mxu0 0.0
    %926 = vmatprep.subr.mxu0 0.0
    %927 = vmatpush1.msra.mxu0 0.0
    %928 = vmatprep.subr.mxu0 0.0
    %929 = vmatpush1.msra.mxu0 0.0
    %930 = vmatprep.subr.mxu0 0.0
    %931 = vmatpush1.msra.mxu0 0.0
    %932 = vmatprep.subr.mxu0 0.0
    %933 = vmatpush1.msra.mxu0 0.0
    %934 = vmatprep.subr.mxu0 0.0
    %935 = vmatpush1.msra.mxu0 0.0
    %936 = vmatprep.subr.mxu0 0.0
    %937 = vmatpush1.msra.mxu0 0.0
    %938 = vmatprep.subr.mxu0 0.0
    %939 = vmatpush1.msra.mxu0 0.0
    %940 = vmatprep.subr.mxu0 0.0
    %941 = vmatpush1.msra.mxu0 0.0
    %942 = vmatprep.subr.mxu0 0.0
    %943 = vmatpush1.msra.mxu0 0.0
    %944 = vmatprep.subr.mxu0 0.0
    %945 = vmatpush1.msra.mxu0 0.0
    %946 = vmatprep.subr.mxu0 0.0
    %947 = vmatpush1.msra.mxu0 0.0
    %948 = vmatprep.subr.mxu0 0.0
    %949 = vmatpush1.msra.mxu0 0.0
    %950 = vmatprep.subr.mxu0 0.0
    %951 = vmatpush1.msra.mxu0 0.0
    %952 = vmatprep.subr.mxu0 0.0
    %953 = vmatpush1.msra.mxu0 0.0
    %954 = vmatprep.subr.mxu0 0.0
    %955 = vmatpush1.msra.mxu0 0.0
    %956 = vmatprep.subr.mxu0 0.0
    %957 = vmatpush1.msra.mxu0 0.0
    %958 = vmatprep.subr.mxu0 0.0
    %959 = vmatpush1.msra.mxu0 0.0
    %960 = vmatprep.subr.mxu0 0.0
    %961 = vmatpush1.msra.mxu0 0.0
    %962 = vmatprep.subr.mxu0 0.0
    %963 = vmatpush1.msra.mxu0 0.0
    %964 = vmatprep.subr.mxu0 0.0
    %965 = vmatpush1.msra.mxu0 0.0
    %966 = vmatprep.subr.mxu0 0.0
    %967 = vmatpush1.msra.mxu0 0.0
    %968 = vmatprep.subr.mxu0 0.0
    %969 = vmatpush1.msra.mxu0 0.0
    %970 = vmatprep.subr.mxu0 0.0
    %971 = vmatpush1.msra.mxu0 0.0
    %972 = vmatprep.subr.mxu0 0.0
    %973 = vmatpush1.msra.mxu0 0.0
    %974 = vmatprep.subr.mxu0 0.0
    %975 = vmatpush1.msra.mxu0 0.0
    %976 = vmatprep.subr.mxu0 0.0
    %977 = vmatpush1.msra.mxu0 0.0
    %978 = vmatprep.subr.mxu0 0.0
    %979 = vmatpush1.msra.mxu0 0.0
    %980 = vmatprep.subr.mxu0 0.0
    %981 = vmatpush1.msra.mxu0 0.0
    %982 = vmatprep.subr.mxu0 0.0
    %983 = vmatpush1.msra.mxu0 0.0
    %984 = vmatprep.subr.mxu0 0.0
    %985 = vmatpush1.msra.mxu0 0.0
    %986 = vmatprep.mubr.f32.mxu0 0.0
    %987 = vmatmul.mubr.f32.gmra.mrb[0].mxu0 %v918
    %v988 = vpop.f32.mrb[0].mxu0
    %v989 = vadd.f32 0.0, %v988
    %v990 = vpop.f32.mrb[0].mxu0
    %991 = vdwg.mxu0
    %v996 = vrot.slane %v559, 7
    %v997 = vsel %vm612, %v996, %v558
    %v998 = vrot.slane %v560, 6
    %v999 = vsel %vm615, %v998, %v997
    %v1000 = vrot.slane %v561, 5
    %v1001 = vsel %vm618, %v1000, %v999
    %vm1002 = vcmask 31744
    %v1004 = vsel %vm1002, %v821, 0
    %vm1006 = vcmask 1043456
    %v1007 = vsel %vm1006, %v1001, 0
    %1009 = vmatprep.subr.mxu0 0.0
    %1010 = vmatpush1.msra.mxu0 %v1007
    %1011 = vmatprep.subr.mxu0 0.0
    %1012 = vmatpush1.msra.mxu0 0.0
    %1013 = vmatprep.subr.mxu0 0.0
    %1014 = vmatpush1.msra.mxu0 0.0
    %1015 = vmatprep.subr.mxu0 0.0
    %1016 = vmatpush1.msra.mxu0 0.0
    %1017 = vmatprep.subr.mxu0 0.0
    %1018 = vmatpush1.msra.mxu0 0.0
    %1019 = vmatprep.subr.mxu0 0.0
    %1020 = vmatpush1.msra.mxu0 0.0
    %1021 = vmatprep.subr.mxu0 0.0
    %1022 = vmatpush1.msra.mxu0 0.0
    %1023 = vmatprep.subr.mxu0 0.0
    %1024 = vmatpush1.msra.mxu0 0.0
    %1025 = vmatprep.subr.mxu0 0.0
    %1026 = vmatpush1.msra.mxu0 0.0
    %1027 = vmatprep.subr.mxu0 0.0
    %1028 = vmatpush1.msra.mxu0 0.0
    %1029 = vmatprep.subr.mxu0 0.0
    %1030 = vmatpush1.msra.mxu0 0.0
    %1031 = vmatprep.subr.mxu0 0.0
    %1032 = vmatpush1.msra.mxu0 0.0
    %1033 = vmatprep.subr.mxu0 0.0
    %1034 = vmatpush1.msra.mxu0 0.0
    %1035 = vmatprep.subr.mxu0 0.0
    %1036 = vmatpush1.msra.mxu0 0.0
    %1037 = vmatprep.subr.mxu0 0.0
    %1038 = vmatpush1.msra.mxu0 0.0
    %1039 = vmatprep.subr.mxu0 0.0
    %1040 = vmatpush1.msra.mxu0 0.0
    %1041 = vmatprep.subr.mxu0 0.0
    %1042 = vmatpush1.msra.mxu0 0.0
    %1043 = vmatprep.subr.mxu0 0.0
    %1044 = vmatpush1.msra.mxu0 0.0
    %1045 = vmatprep.subr.mxu0 0.0
    %1046 = vmatpush1.msra.mxu0 0.0
    %1047 = vmatprep.subr.mxu0 0.0
    %1048 = vmatpush1.msra.mxu0 0.0
    %1049 = vmatprep.subr.mxu0 0.0
    %1050 = vmatpush1.msra.mxu0 0.0
    %1051 = vmatprep.subr.mxu0 0.0
    %1052 = vmatpush1.msra.mxu0 0.0
    %1053 = vmatprep.subr.mxu0 0.0
    %1054 = vmatpush1.msra.mxu0 0.0
    %1055 = vmatprep.subr.mxu0 0.0
    %1056 = vmatpush1.msra.mxu0 0.0
    %1057 = vmatprep.subr.mxu0 0.0
    %1058 = vmatpush1.msra.mxu0 0.0
    %1059 = vmatprep.subr.mxu0 0.0
    %1060 = vmatpush1.msra.mxu0 0.0
    %1061 = vmatprep.subr.mxu0 0.0
    %1062 = vmatpush1.msra.mxu0 0.0
    %1063 = vmatprep.subr.mxu0 0.0
    %1064 = vmatpush1.msra.mxu0 0.0
    %1065 = vmatprep.subr.mxu0 0.0
    %1066 = vmatpush1.msra.mxu0 0.0
    %1067 = vmatprep.subr.mxu0 0.0
    %1068 = vmatpush1.msra.mxu0 0.0
    %1069 = vmatprep.subr.mxu0 0.0
    %1070 = vmatpush1.msra.mxu0 0.0
    %1071 = vmatprep.subr.mxu0 0.0
    %1072 = vmatpush1.msra.mxu0 0.0
    %1073 = vmatprep.mubr.f32.mxu0 0.0
    %1074 = vmatmul.mubr.f32.gmra.mrb[0].mxu0 %v1004
    %v1075 = vpop.f32.mrb[0].mxu0
    %v1076 = vadd.f32 %v914, %v1075
    %v1077 = vpop.f32.mrb[0].mxu0
    %1078 = vdwg.mxu0
    %v1083 = vrot.slane %v563, 7
    %v1084 = vsel %vm612, %v1083, %v562
    %v1085 = vrot.slane %v564, 6
    %v1086 = vsel %vm615, %v1085, %v1084
    %v1087 = vrot.slane %v565, 5
    %v1088 = vsel %vm618, %v1087, %v1086
    %v1090 = vsel %vm1002, %v823, 0
    %v1092 = vsel %vm1006, %v1088, 0
    %1094 = vmatprep.subr.mxu0 0.0
    %1095 = vmatpush1.msra.mxu0 %v1092
    %1096 = vmatprep.subr.mxu0 0.0
    %1097 = vmatpush1.msra.mxu0 0.0
    %1098 = vmatprep.subr.mxu0 0.0
    %1099 = vmatpush1.msra.mxu0 0.0
    %1100 = vmatprep.subr.mxu0 0.0
    %1101 = vmatpush1.msra.mxu0 0.0
    %1102 = vmatprep.subr.mxu0 0.0
    %1103 = vmatpush1.msra.mxu0 0.0
    %1104 = vmatprep.subr.mxu0 0.0
    %1105 = vmatpush1.msra.mxu0 0.0
    %1106 = vmatprep.subr.mxu0 0.0
    %1107 = vmatpush1.msra.mxu0 0.0
    %1108 = vmatprep.subr.mxu0 0.0
    %1109 = vmatpush1.msra.mxu0 0.0
    %1110 = vmatprep.subr.mxu0 0.0
    %1111 = vmatpush1.msra.mxu0 0.0
    %1112 = vmatprep.subr.mxu0 0.0
    %1113 = vmatpush1.msra.mxu0 0.0
    %1114 = vmatprep.subr.mxu0 0.0
    %1115 = vmatpush1.msra.mxu0 0.0
    %1116 = vmatprep.subr.mxu0 0.0
    %1117 = vmatpush1.msra.mxu0 0.0
    %1118 = vmatprep.subr.mxu0 0.0
    %1119 = vmatpush1.msra.mxu0 0.0
    %1120 = vmatprep.subr.mxu0 0.0
    %1121 = vmatpush1.msra.mxu0 0.0
    %1122 = vmatprep.subr.mxu0 0.0
    %1123 = vmatpush1.msra.mxu0 0.0
    %1124 = vmatprep.subr.mxu0 0.0
    %1125 = vmatpush1.msra.mxu0 0.0
    %1126 = vmatprep.subr.mxu0 0.0
    %1127 = vmatpush1.msra.mxu0 0.0
    %1128 = vmatprep.subr.mxu0 0.0
    %1129 = vmatpush1.msra.mxu0 0.0
    %1130 = vmatprep.subr.mxu0 0.0
    %1131 = vmatpush1.msra.mxu0 0.0
    %1132 = vmatprep.subr.mxu0 0.0
    %1133 = vmatpush1.msra.mxu0 0.0
    %1134 = vmatprep.subr.mxu0 0.0
    %1135 = vmatpush1.msra.mxu0 0.0
    %1136 = vmatprep.subr.mxu0 0.0
    %1137 = vmatpush1.msra.mxu0 0.0
    %1138 = vmatprep.subr.mxu0 0.0
    %1139 = vmatpush1.msra.mxu0 0.0
    %1140 = vmatprep.subr.mxu0 0.0
    %1141 = vmatpush1.msra.mxu0 0.0
    %1142 = vmatprep.subr.mxu0 0.0
    %1143 = vmatpush1.msra.mxu0 0.0
    %1144 = vmatprep.subr.mxu0 0.0
    %1145 = vmatpush1.msra.mxu0 0.0
    %1146 = vmatprep.subr.mxu0 0.0
    %1147 = vmatpush1.msra.mxu0 0.0
    %1148 = vmatprep.subr.mxu0 0.0
    %1149 = vmatpush1.msra.mxu0 0.0
    %1150 = vmatprep.subr.mxu0 0.0
    %1151 = vmatpush1.msra.mxu0 0.0
    %1152 = vmatprep.subr.mxu0 0.0
    %1153 = vmatpush1.msra.mxu0 0.0
    %1154 = vmatprep.subr.mxu0 0.0
    %1155 = vmatpush1.msra.mxu0 0.0
    %1156 = vmatprep.subr.mxu0 0.0
    %1157 = vmatpush1.msra.mxu0 0.0
    %1158 = vmatprep.mubr.f32.mxu0 0.0
    %1159 = vmatmul.mubr.f32.gmra.mrb[0].mxu0 %v1090
    %v1160 = vpop.f32.mrb[0].mxu0
    %v1161 = vadd.f32 %v989, %v1160
    %v1162 = vpop.f32.mrb[0].mxu0
    %1163 = vdwg.mxu0
    %1165 = vset.pattern.permute.xlu0 0
    %1166 = vperm.xlu0 %1165, %v840
    %v1167 = vpop.permute.xlu0 %1166
    %1170 = vset.pattern.permute.xlu0 0
    %1171 = vperm.xlu0 %1170, %v841
    %v1172 = vpop.permute.xlu0 %1171
    %v1174 = vmul.f32 %v1076, %v1167
    %v1175 = vmul.f32 %v1161, %v1172
    %v1178 = vrot.slane %v1175, 7
    %v1179 = vsel %vm612, %v1178, %v1174
    %1181 = vst.msk [vmem:[#allocation2] sm:$0x3] %vm786, %v1179
    %v1182 = vsel %vm615, %v1178, %v1174
    %1183 = vrot.lane.b32.xlu0 %v1182, 8
    %v1184 = vpop.permute.xlu0 %1183
    %vm1186 = vcmask 124993
    %1187 = vst.msk [vmem:[#allocation2 - $0x1] sm:$0x6] %vm1186, %v1184
    %1188 = vrot.lane.b32.xlu0 %v783, 120
    %v1189 = vpop.permute.xlu0 %1188
    %1190 = vrot.lane.b32.xlu0 %v793, 120
    %v1191 = vpop.permute.xlu0 %1190
    %1194 = vst.msk [vmem:[#allocation7 + $0x1] sm:$0x1] %vm543, %v1189
    %1195 = vst.msk [vmem:[#allocation7 + $0x3] sm:$0x1] %vm543, %v1191
    %v1196 = vlaneseq
    %v1197 = vshrl.u32 %v1196, 7
    %v1198 = vsub.s32 0, %v1197
    %v1199 = vrot.slane %v533, %v1198
    %v1200 = vlaneseq
    %v1201 = vshrl.u32 %v1200, 7
    %v1202 = vsub.s32 0, %v1201
    %v1203 = vrot.slane %v540, %v1202
    %1204 = vrot.lane.b32.xlu0 %v1199, 120
    %v1205 = vpop.permute.xlu0 %1204
    %1206 = vrot.lane.b32.xlu0 %v1203, 120
    %v1207 = vpop.permute.xlu0 %1206
    %1210 = vst.msk [vmem:[#allocation8 + $0x1] sm:$0x1] %vm543, %v1205
    %1211 = vst.msk [vmem:[#allocation8 + $0x3] sm:$0x1] %vm543, %v1207
    %v1212 = vld [vmem:[#allocation3 + $0x1] sm:$0x1]
    %v1213 = vld [vmem:[#allocation3 + $0x3] sm:$0x1]
    %v1214 = vld [vmem:[#allocation3 + $0x5] sm:$0x1]
    %v1215 = vld [vmem:[#allocation3 + $0x7] sm:$0x1]
    %v1216 = vld [vmem:[#allocation3 + $0x9] sm:$0x1]
    %v1217 = vld [vmem:[#allocation3 + $0xb] sm:$0x1]
    %v1218 = vld [vmem:[#allocation3 + $0xd] sm:$0x1]
    %v1219 = vld [vmem:[#allocation3 + $0xf] sm:$0x1]
    %v1220 = vld [vmem:[#allocation4 + $0x1] sm:$0x1]
    %v1221 = vld [vmem:[#allocation4 + $0x3] sm:$0x1]
    %v1222 = vld [vmem:[#allocation4 + $0x5] sm:$0x1]
    %v1223 = vld [vmem:[#allocation4 + $0x7] sm:$0x1]
    %v1224 = vld [vmem:[#allocation4 + $0x9] sm:$0x1]
    %v1225 = vld [vmem:[#allocation4 + $0xb] sm:$0x1]
    %v1226 = vld [vmem:[#allocation4 + $0xd] sm:$0x1]
    %v1227 = vld [vmem:[#allocation4 + $0xf] sm:$0x1]
    %1228 = vrot.lane.b32.xlu0 %v605, 112
    %v1229 = vpop.permute.xlu0 %1228
    %v1234 = vrot.slane %v1213, 7
    %v1235 = vsel %vm612, %v1234, %v1212
    %v1236 = vrot.slane %v1214, 6
    %v1237 = vsel %vm615, %v1236, %v1235
    %v1238 = vrot.slane %v1215, 5
    %v1239 = vsel %vm618, %v1238, %v1237
    %v1240 = vsel %vm428, %v1229, 0
    %v1242 = vsel %vm428, %v1239, 0
    %1244 = vmatprep.subr.mxu0 0.0
    %1245 = vmatpush1.xpose.msra.mxu0 %v1242
    %1246 = vmatprep.subr.mxu0 0.0
    %1247 = vmatpush1.xpose.msra.mxu0 0.0
    %1248 = vmatprep.subr.mxu0 0.0
    %1249 = vmatpush1.xpose.msra.mxu0 0.0
    %1250 = vmatprep.subr.mxu0 0.0
    %1251 = vmatpush1.xpose.msra.mxu0 0.0
    %1252 = vmatprep.subr.mxu0 0.0
    %1253 = vmatpush1.xpose.msra.mxu0 0.0
    %1254 = vmatprep.subr.mxu0 0.0
    %1255 = vmatpush1.xpose.msra.mxu0 0.0
    %1256 = vmatprep.subr.mxu0 0.0
    %1257 = vmatpush1.xpose.msra.mxu0 0.0
    %1258 = vmatprep.subr.mxu0 0.0
    %1259 = vmatpush1.xpose.msra.mxu0 0.0
    %1260 = vmatprep.subr.mxu0 0.0
    %1261 = vmatpush1.xpose.msra.mxu0 0.0
    %1262 = vmatprep.subr.mxu0 0.0
    %1263 = vmatpush1.xpose.msra.mxu0 0.0
    %1264 = vmatprep.subr.mxu0 0.0
    %1265 = vmatpush1.xpose.msra.mxu0 0.0
    %1266 = vmatprep.subr.mxu0 0.0
    %1267 = vmatpush1.xpose.msra.mxu0 0.0
    %1268 = vmatprep.subr.mxu0 0.0
    %1269 = vmatpush1.xpose.msra.mxu0 0.0
    %1270 = vmatprep.subr.mxu0 0.0
    %1271 = vmatpush1.xpose.msra.mxu0 0.0
    %1272 = vmatprep.subr.mxu0 0.0
    %1273 = vmatpush1.xpose.msra.mxu0 0.0
    %1274 = vmatprep.subr.mxu0 0.0
    %1275 = vmatpush1.xpose.msra.mxu0 0.0
    %1276 = vmatprep.subr.mxu0 0.0
    %1277 = vmatpush1.xpose.msra.mxu0 0.0
    %1278 = vmatprep.subr.mxu0 0.0
    %1279 = vmatpush1.xpose.msra.mxu0 0.0
    %1280 = vmatprep.subr.mxu0 0.0
    %1281 = vmatpush1.xpose.msra.mxu0 0.0
    %1282 = vmatprep.subr.mxu0 0.0
    %1283 = vmatpush1.xpose.msra.mxu0 0.0
    %1284 = vmatprep.subr.mxu0 0.0
    %1285 = vmatpush1.xpose.msra.mxu0 0.0
    %1286 = vmatprep.subr.mxu0 0.0
    %1287 = vmatpush1.xpose.msra.mxu0 0.0
    %1288 = vmatprep.subr.mxu0 0.0
    %1289 = vmatpush1.xpose.msra.mxu0 0.0
    %1290 = vmatprep.subr.mxu0 0.0
    %1291 = vmatpush1.xpose.msra.mxu0 0.0
    %1292 = vmatprep.subr.mxu0 0.0
    %1293 = vmatpush1.xpose.msra.mxu0 0.0
    %1294 = vmatprep.subr.mxu0 0.0
    %1295 = vmatpush1.xpose.msra.mxu0 0.0
    %1296 = vmatprep.subr.mxu0 0.0
    %1297 = vmatpush1.xpose.msra.mxu0 0.0
    %1298 = vmatprep.subr.mxu0 0.0
    %1299 = vmatpush1.xpose.msra.mxu0 0.0
    %1300 = vmatprep.subr.mxu0 0.0
    %1301 = vmatpush1.xpose.msra.mxu0 0.0
    %1302 = vmatprep.subr.mxu0 0.0
    %1303 = vmatpush1.xpose.msra.mxu0 0.0
    %1304 = vmatprep.subr.mxu0 0.0
    %1305 = vmatpush1.xpose.msra.mxu0 0.0
    %1306 = vmatprep.subr.mxu0 0.0
    %1307 = vmatpush1.xpose.msra.mxu0 0.0
    %1308 = vmatprep.mubr.f32.mxu0 0.0
    %1309 = vmatmul.mubr.f32.gmra.mrb[0].mxu0 %v1240
    %v1310 = vpop.f32.mrb[0].mxu0
    %v1311 = vadd.f32 0.0, %v1310
    %v1312 = vpop.f32.mrb[0].mxu0
    %1313 = vdwg.mxu0
    %1314 = vrot.lane.b32.xlu0 %v606, 112
    %v1315 = vpop.permute.xlu0 %1314
    %v1320 = vrot.slane %v1217, 7
    %v1321 = vsel %vm612, %v1320, %v1216
    %v1322 = vrot.slane %v1218, 6
    %v1323 = vsel %vm615, %v1322, %v1321
    %v1324 = vrot.slane %v1219, 5
    %v1325 = vsel %vm618, %v1324, %v1323
    %v1326 = vsel %vm428, %v1315, 0
    %v1328 = vsel %vm428, %v1325, 0
    %1330 = vmatprep.subr.mxu0 0.0
    %1331 = vmatpush1.xpose.msra.mxu0 %v1328
    %1332 = vmatprep.subr.mxu0 0.0
    %1333 = vmatpush1.xpose.msra.mxu0 0.0
    %1334 = vmatprep.subr.mxu0 0.0
    %1335 = vmatpush1.xpose.msra.mxu0 0.0
    %1336 = vmatprep.subr.mxu0 0.0
    %1337 = vmatpush1.xpose.msra.mxu0 0.0
    %1338 = vmatprep.subr.mxu0 0.0
    %1339 = vmatpush1.xpose.msra.mxu0 0.0
    %1340 = vmatprep.subr.mxu0 0.0
    %1341 = vmatpush1.xpose.msra.mxu0 0.0
    %1342 = vmatprep.subr.mxu0 0.0
    %1343 = vmatpush1.xpose.msra.mxu0 0.0
    %1344 = vmatprep.subr.mxu0 0.0
    %1345 = vmatpush1.xpose.msra.mxu0 0.0
    %1346 = vmatprep.subr.mxu0 0.0
    %1347 = vmatpush1.xpose.msra.mxu0 0.0
    %1348 = vmatprep.subr.mxu0 0.0
    %1349 = vmatpush1.xpose.msra.mxu0 0.0
    %1350 = vmatprep.subr.mxu0 0.0
    %1351 = vmatpush1.xpose.msra.mxu0 0.0
    %1352 = vmatprep.subr.mxu0 0.0
    %1353 = vmatpush1.xpose.msra.mxu0 0.0
    %1354 = vmatprep.subr.mxu0 0.0
    %1355 = vmatpush1.xpose.msra.mxu0 0.0
    %1356 = vmatprep.subr.mxu0 0.0
    %1357 = vmatpush1.xpose.msra.mxu0 0.0
    %1358 = vmatprep.subr.mxu0 0.0
    %1359 = vmatpush1.xpose.msra.mxu0 0.0
    %1360 = vmatprep.subr.mxu0 0.0
    %1361 = vmatpush1.xpose.msra.mxu0 0.0
    %1362 = vmatprep.subr.mxu0 0.0
    %1363 = vmatpush1.xpose.msra.mxu0 0.0
    %1364 = vmatprep.subr.mxu0 0.0
    %1365 = vmatpush1.xpose.msra.mxu0 0.0
    %1366 = vmatprep.subr.mxu0 0.0
    %1367 = vmatpush1.xpose.msra.mxu0 0.0
    %1368 = vmatprep.subr.mxu0 0.0
    %1369 = vmatpush1.xpose.msra.mxu0 0.0
    %1370 = vmatprep.subr.mxu0 0.0
    %1371 = vmatpush1.xpose.msra.mxu0 0.0
    %1372 = vmatprep.subr.mxu0 0.0
    %1373 = vmatpush1.xpose.msra.mxu0 0.0
    %1374 = vmatprep.subr.mxu0 0.0
    %1375 = vmatpush1.xpose.msra.mxu0 0.0
    %1376 = vmatprep.subr.mxu0 0.0
    %1377 = vmatpush1.xpose.msra.mxu0 0.0
    %1378 = vmatprep.subr.mxu0 0.0
    %1379 = vmatpush1.xpose.msra.mxu0 0.0
    %1380 = vmatprep.subr.mxu0 0.0
    %1381 = vmatpush1.xpose.msra.mxu0 0.0
    %1382 = vmatprep.subr.mxu0 0.0
    %1383 = vmatpush1.xpose.msra.mxu0 0.0
    %1384 = vmatprep.subr.mxu0 0.0
    %1385 = vmatpush1.xpose.msra.mxu0 0.0
    %1386 = vmatprep.subr.mxu0 0.0
    %1387 = vmatpush1.xpose.msra.mxu0 0.0
    %1388 = vmatprep.subr.mxu0 0.0
    %1389 = vmatpush1.xpose.msra.mxu0 0.0
    %1390 = vmatprep.subr.mxu0 0.0
    %1391 = vmatpush1.xpose.msra.mxu0 0.0
    %1392 = vmatprep.subr.mxu0 0.0
    %1393 = vmatpush1.xpose.msra.mxu0 0.0
    %1394 = vmatprep.mubr.f32.mxu0 0.0
    %1395 = vmatmul.mubr.f32.gmra.mrb[0].mxu0 %v1326
    %v1396 = vpop.f32.mrb[0].mxu0
    %v1397 = vadd.f32 0.0, %v1396
    %v1398 = vpop.f32.mrb[0].mxu0
    %1399 = vdwg.mxu0
    %1400 = vrot.lane.b32.xlu0 %v783, 8
    %v1401 = vpop.permute.xlu0 %1400
    %v1403 = vmul.f32 %v605, %v1401
    %1405 = vrot.lane.b32.xlu0 %v1403, 112
    %v1406 = vpop.permute.xlu0 %1405
    %v1408 = vsel %vm786, %v1406, 0.0
    %1409 = vadd.xlane.f32.xlu0 %v1408
    %v1410 = vpop.xlane.xlu0 %1409
    %1411 = vrot.lane.b32.xlu0 %v793, 8
    %v1412 = vpop.permute.xlu0 %1411
    %v1414 = vmul.f32 %v606, %v1412
    %1416 = vrot.lane.b32.xlu0 %v1414, 112
    %v1417 = vpop.permute.xlu0 %1416
    %v1419 = vsel %vm786, %v1417, 0.0
    %1420 = vadd.xlane.f32.xlu0 %v1419
    %v1421 = vpop.xlane.xlu0 %1420
    %v1422 = vsel %vm799, %v1311, -inf
    %1423 = vmax.xlane.f32.xlu0 %v1422
    %v1424 = vpop.xlane.xlu0 %1423
    %v1425 = vsel %vm799, %v1397, -inf
    %1426 = vmax.xlane.f32.xlu0 %v1425
    %v1427 = vpop.xlane.xlu0 %1426
    %v1428 = vmax.f32 %v1424, %v1410
    %v1429 = vmax.f32 %v1427, %v1421
    %1431 = vset.pattern.permute.xlu0 0
    %1432 = vperm.xlu0 %1431, %v1428
    %v1433 = vpop.permute.xlu0 %1432
    %1436 = vset.pattern.permute.xlu0 0
    %1437 = vperm.xlu0 %1436, %v1429
    %v1438 = vpop.permute.xlu0 %1437
    %v1440 = vsub.f32 %v1311, %v1433
    %v1441 = vsub.f32 %v1397, %v1438
    %v1442 = vmul.f32 %v1440, 1.442695
    %v1443 = vpow.pop %v1442
    %v1444 = vmul.f32 %v1441, 1.442695
    %v1445 = vpow.pop %v1444
    %v1446 = vsub.f32 %v1410, %v1428
    %v1447 = vsub.f32 %v1421, %v1429
    %v1448 = vmul.f32 %v1446, 1.442695
    %v1449 = vpow.pop %v1448
    %v1450 = vmul.f32 %v1447, 1.442695
    %v1451 = vpow.pop %v1450
    %v1452 = vsel %vm799, %v1443, 0.0
    %1453 = vadd.xlane.f32.xlu0 %v1452
    %v1454 = vpop.xlane.xlu0 %1453
    %v1455 = vsel %vm799, %v1445, 0.0
    %1456 = vadd.xlane.f32.xlu0 %v1455
    %v1457 = vpop.xlane.xlu0 %1456
    %v1458 = vadd.f32 %v1449, 0.0
    %v1459 = vadd.f32 %v1451, 0.0
    %v1460 = vadd.f32 %v1454, %v1458
    %v1461 = vadd.f32 %v1457, %v1459
    %v1462 = vrcp.pop %v1460
    %v1463 = vrcp.pop %v1461
    %v1465 = vsel %vm467, %v1449, 0
    %v1467 = vsel %vm408, %v1205, 0
    %1469 = vmatprep.subr.mxu0 0.0
    %1470 = vmatpush1.msra.mxu0 %v1467
    %1471 = vmatprep.subr.mxu0 0.0
    %1472 = vmatpush1.msra.mxu0 0.0
    %1473 = vmatprep.subr.mxu0 0.0
    %1474 = vmatpush1.msra.mxu0 0.0
    %1475 = vmatprep.subr.mxu0 0.0
    %1476 = vmatpush1.msra.mxu0 0.0
    %1477 = vmatprep.subr.mxu0 0.0
    %1478 = vmatpush1.msra.mxu0 0.0
    %1479 = vmatprep.subr.mxu0 0.0
    %1480 = vmatpush1.msra.mxu0 0.0
    %1481 = vmatprep.subr.mxu0 0.0
    %1482 = vmatpush1.msra.mxu0 0.0
    %1483 = vmatprep.subr.mxu0 0.0
    %1484 = vmatpush1.msra.mxu0 0.0
    %1485 = vmatprep.subr.mxu0 0.0
    %1486 = vmatpush1.msra.mxu0 0.0
    %1487 = vmatprep.subr.mxu0 0.0
    %1488 = vmatpush1.msra.mxu0 0.0
    %1489 = vmatprep.subr.mxu0 0.0
    %1490 = vmatpush1.msra.mxu0 0.0
    %1491 = vmatprep.subr.mxu0 0.0
    %1492 = vmatpush1.msra.mxu0 0.0
    %1493 = vmatprep.subr.mxu0 0.0
    %1494 = vmatpush1.msra.mxu0 0.0
    %1495 = vmatprep.subr.mxu0 0.0
    %1496 = vmatpush1.msra.mxu0 0.0
    %1497 = vmatprep.subr.mxu0 0.0
    %1498 = vmatpush1.msra.mxu0 0.0
    %1499 = vmatprep.subr.mxu0 0.0
    %1500 = vmatpush1.msra.mxu0 0.0
    %1501 = vmatprep.subr.mxu0 0.0
    %1502 = vmatpush1.msra.mxu0 0.0
    %1503 = vmatprep.subr.mxu0 0.0
    %1504 = vmatpush1.msra.mxu0 0.0
    %1505 = vmatprep.subr.mxu0 0.0
    %1506 = vmatpush1.msra.mxu0 0.0
    %1507 = vmatprep.subr.mxu0 0.0
    %1508 = vmatpush1.msra.mxu0 0.0
    %1509 = vmatprep.subr.mxu0 0.0
    %1510 = vmatpush1.msra.mxu0 0.0
    %1511 = vmatprep.subr.mxu0 0.0
    %1512 = vmatpush1.msra.mxu0 0.0
    %1513 = vmatprep.subr.mxu0 0.0
    %1514 = vmatpush1.msra.mxu0 0.0
    %1515 = vmatprep.subr.mxu0 0.0
    %1516 = vmatpush1.msra.mxu0 0.0
    %1517 = vmatprep.subr.mxu0 0.0
    %1518 = vmatpush1.msra.mxu0 0.0
    %1519 = vmatprep.subr.mxu0 0.0
    %1520 = vmatpush1.msra.mxu0 0.0
    %1521 = vmatprep.subr.mxu0 0.0
    %1522 = vmatpush1.msra.mxu0 0.0
    %1523 = vmatprep.subr.mxu0 0.0
    %1524 = vmatpush1.msra.mxu0 0.0
    %1525 = vmatprep.subr.mxu0 0.0
    %1526 = vmatpush1.msra.mxu0 0.0
    %1527 = vmatprep.subr.mxu0 0.0
    %1528 = vmatpush1.msra.mxu0 0.0
    %1529 = vmatprep.subr.mxu0 0.0
    %1530 = vmatpush1.msra.mxu0 0.0
    %1531 = vmatprep.subr.mxu0 0.0
    %1532 = vmatpush1.msra.mxu0 0.0
    %1533 = vmatprep.mubr.f32.mxu0 0.0
    %1534 = vmatmul.mubr.f32.gmra.mrb[0].mxu0 %v1465
    %v1535 = vpop.f32.mrb[0].mxu0
    %v1536 = vadd.f32 0.0, %v1535
    %v1537 = vpop.f32.mrb[0].mxu0
    %1538 = vdwg.mxu0
    %v1540 = vsel %vm467, %v1451, 0
    %v1542 = vsel %vm408, %v1207, 0
    %1544 = vmatprep.subr.mxu0 0.0
    %1545 = vmatpush1.msra.mxu0 %v1542
    %1546 = vmatprep.subr.mxu0 0.0
    %1547 = vmatpush1.msra.mxu0 0.0
    %1548 = vmatprep.subr.mxu0 0.0
    %1549 = vmatpush1.msra.mxu0 0.0
    %1550 = vmatprep.subr.mxu0 0.0
    %1551 = vmatpush1.msra.mxu0 0.0
    %1552 = vmatprep.subr.mxu0 0.0
    %1553 = vmatpush1.msra.mxu0 0.0
    %1554 = vmatprep.subr.mxu0 0.0
    %1555 = vmatpush1.msra.mxu0 0.0
    %1556 = vmatprep.subr.mxu0 0.0
    %1557 = vmatpush1.msra.mxu0 0.0
    %1558 = vmatprep.subr.mxu0 0.0
    %1559 = vmatpush1.msra.mxu0 0.0
    %1560 = vmatprep.subr.mxu0 0.0
    %1561 = vmatpush1.msra.mxu0 0.0
    %1562 = vmatprep.subr.mxu0 0.0
    %1563 = vmatpush1.msra.mxu0 0.0
    %1564 = vmatprep.subr.mxu0 0.0
    %1565 = vmatpush1.msra.mxu0 0.0
    %1566 = vmatprep.subr.mxu0 0.0
    %1567 = vmatpush1.msra.mxu0 0.0
    %1568 = vmatprep.subr.mxu0 0.0
    %1569 = vmatpush1.msra.mxu0 0.0
    %1570 = vmatprep.subr.mxu0 0.0
    %1571 = vmatpush1.msra.mxu0 0.0
    %1572 = vmatprep.subr.mxu0 0.0
    %1573 = vmatpush1.msra.mxu0 0.0
    %1574 = vmatprep.subr.mxu0 0.0
    %1575 = vmatpush1.msra.mxu0 0.0
    %1576 = vmatprep.subr.mxu0 0.0
    %1577 = vmatpush1.msra.mxu0 0.0
    %1578 = vmatprep.subr.mxu0 0.0
    %1579 = vmatpush1.msra.mxu0 0.0
    %1580 = vmatprep.subr.mxu0 0.0
    %1581 = vmatpush1.msra.mxu0 0.0
    %1582 = vmatprep.subr.mxu0 0.0
    %1583 = vmatpush1.msra.mxu0 0.0
    %1584 = vmatprep.subr.mxu0 0.0
    %1585 = vmatpush1.msra.mxu0 0.0
    %1586 = vmatprep.subr.mxu0 0.0
    %1587 = vmatpush1.msra.mxu0 0.0
    %1588 = vmatprep.subr.mxu0 0.0
    %1589 = vmatpush1.msra.mxu0 0.0
    %1590 = vmatprep.subr.mxu0 0.0
    %1591 = vmatpush1.msra.mxu0 0.0
    %1592 = vmatprep.subr.mxu0 0.0
    %1593 = vmatpush1.msra.mxu0 0.0
    %1594 = vmatprep.subr.mxu0 0.0
    %1595 = vmatpush1.msra.mxu0 0.0
    %1596 = vmatprep.subr.mxu0 0.0
    %1597 = vmatpush1.msra.mxu0 0.0
    %1598 = vmatprep.subr.mxu0 0.0
    %1599 = vmatpush1.msra.mxu0 0.0
    %1600 = vmatprep.subr.mxu0 0.0
    %1601 = vmatpush1.msra.mxu0 0.0
    %1602 = vmatprep.subr.mxu0 0.0
    %1603 = vmatpush1.msra.mxu0 0.0
    %1604 = vmatprep.subr.mxu0 0.0
    %1605 = vmatpush1.msra.mxu0 0.0
    %1606 = vmatprep.subr.mxu0 0.0
    %1607 = vmatpush1.msra.mxu0 0.0
    %1608 = vmatprep.mubr.f32.mxu0 0.0
    %1609 = vmatmul.mubr.f32.gmra.mrb[0].mxu0 %v1540
    %v1610 = vpop.f32.mrb[0].mxu0
    %v1611 = vadd.f32 0.0, %v1610
    %v1612 = vpop.f32.mrb[0].mxu0
    %1613 = vdwg.mxu0
    %v1618 = vrot.slane %v1221, 7
    %v1619 = vsel %vm612, %v1618, %v1220
    %v1620 = vrot.slane %v1222, 6
    %v1621 = vsel %vm615, %v1620, %v1619
    %v1622 = vrot.slane %v1223, 5
    %v1623 = vsel %vm618, %v1622, %v1621
    %v1625 = vsel %vm1002, %v1443, 0
    %v1627 = vsel %vm1006, %v1623, 0
    %1629 = vmatprep.subr.mxu0 0.0
    %1630 = vmatpush1.msra.mxu0 %v1627
    %1631 = vmatprep.subr.mxu0 0.0
    %1632 = vmatpush1.msra.mxu0 0.0
    %1633 = vmatprep.subr.mxu0 0.0
    %1634 = vmatpush1.msra.mxu0 0.0
    %1635 = vmatprep.subr.mxu0 0.0
    %1636 = vmatpush1.msra.mxu0 0.0
    %1637 = vmatprep.subr.mxu0 0.0
    %1638 = vmatpush1.msra.mxu0 0.0
    %1639 = vmatprep.subr.mxu0 0.0
    %1640 = vmatpush1.msra.mxu0 0.0
    %1641 = vmatprep.subr.mxu0 0.0
    %1642 = vmatpush1.msra.mxu0 0.0
    %1643 = vmatprep.subr.mxu0 0.0
    %1644 = vmatpush1.msra.mxu0 0.0
    %1645 = vmatprep.subr.mxu0 0.0
    %1646 = vmatpush1.msra.mxu0 0.0
    %1647 = vmatprep.subr.mxu0 0.0
    %1648 = vmatpush1.msra.mxu0 0.0
    %1649 = vmatprep.subr.mxu0 0.0
    %1650 = vmatpush1.msra.mxu0 0.0
    %1651 = vmatprep.subr.mxu0 0.0
    %1652 = vmatpush1.msra.mxu0 0.0
    %1653 = vmatprep.subr.mxu0 0.0
    %1654 = vmatpush1.msra.mxu0 0.0
    %1655 = vmatprep.subr.mxu0 0.0
    %1656 = vmatpush1.msra.mxu0 0.0
    %1657 = vmatprep.subr.mxu0 0.0
    %1658 = vmatpush1.msra.mxu0 0.0
    %1659 = vmatprep.subr.mxu0 0.0
    %1660 = vmatpush1.msra.mxu0 0.0
    %1661 = vmatprep.subr.mxu0 0.0
    %1662 = vmatpush1.msra.mxu0 0.0
    %1663 = vmatprep.subr.mxu0 0.0
    %1664 = vmatpush1.msra.mxu0 0.0
    %1665 = vmatprep.subr.mxu0 0.0
    %1666 = vmatpush1.msra.mxu0 0.0
    %1667 = vmatprep.subr.mxu0 0.0
    %1668 = vmatpush1.msra.mxu0 0.0
    %1669 = vmatprep.subr.mxu0 0.0
    %1670 = vmatpush1.msra.mxu0 0.0
    %1671 = vmatprep.subr.mxu0 0.0
    %1672 = vmatpush1.msra.mxu0 0.0
    %1673 = vmatprep.subr.mxu0 0.0
    %1674 = vmatpush1.msra.mxu0 0.0
    %1675 = vmatprep.subr.mxu0 0.0
    %1676 = vmatpush1.msra.mxu0 0.0
    %1677 = vmatprep.subr.mxu0 0.0
    %1678 = vmatpush1.msra.mxu0 0.0
    %1679 = vmatprep.subr.mxu0 0.0
    %1680 = vmatpush1.msra.mxu0 0.0
    %1681 = vmatprep.subr.mxu0 0.0
    %1682 = vmatpush1.msra.mxu0 0.0
    %1683 = vmatprep.subr.mxu0 0.0
    %1684 = vmatpush1.msra.mxu0 0.0
    %1685 = vmatprep.subr.mxu0 0.0
    %1686 = vmatpush1.msra.mxu0 0.0
    %1687 = vmatprep.subr.mxu0 0.0
    %1688 = vmatpush1.msra.mxu0 0.0
    %1689 = vmatprep.subr.mxu0 0.0
    %1690 = vmatpush1.msra.mxu0 0.0
    %1691 = vmatprep.subr.mxu0 0.0
    %1692 = vmatpush1.msra.mxu0 0.0
    %1693 = vmatprep.mubr.f32.mxu0 0.0
    %1694 = vmatmul.mubr.f32.gmra.mrb[0].mxu0 %v1625
    %v1695 = vpop.f32.mrb[0].mxu0
    %v1696 = vadd.f32 %v1536, %v1695
    %v1697 = vpop.f32.mrb[0].mxu0
    %1698 = vdwg.mxu0
    %v1703 = vrot.slane %v1225, 7
    %v1704 = vsel %vm612, %v1703, %v1224
    %v1705 = vrot.slane %v1226, 6
    %v1706 = vsel %vm615, %v1705, %v1704
    %v1707 = vrot.slane %v1227, 5
    %v1708 = vsel %vm618, %v1707, %v1706
    %v1710 = vsel %vm1002, %v1445, 0
    %v1712 = vsel %vm1006, %v1708, 0
    %1714 = vmatprep.subr.mxu0 0.0
    %1715 = vmatpush1.msra.mxu0 %v1712
    %1716 = vmatprep.subr.mxu0 0.0
    %1717 = vmatpush1.msra.mxu0 0.0
    %1718 = vmatprep.subr.mxu0 0.0
    %1719 = vmatpush1.msra.mxu0 0.0
    %1720 = vmatprep.subr.mxu0 0.0
    %1721 = vmatpush1.msra.mxu0 0.0
    %1722 = vmatprep.subr.mxu0 0.0
    %1723 = vmatpush1.msra.mxu0 0.0
    %1724 = vmatprep.subr.mxu0 0.0
    %1725 = vmatpush1.msra.mxu0 0.0
    %1726 = vmatprep.subr.mxu0 0.0
    %1727 = vmatpush1.msra.mxu0 0.0
    %1728 = vmatprep.subr.mxu0 0.0
    %1729 = vmatpush1.msra.mxu0 0.0
    %1730 = vmatprep.subr.mxu0 0.0
    %1731 = vmatpush1.msra.mxu0 0.0
    %1732 = vmatprep.subr.mxu0 0.0
    %1733 = vmatpush1.msra.mxu0 0.0
    %1734 = vmatprep.subr.mxu0 0.0
    %1735 = vmatpush1.msra.mxu0 0.0
    %1736 = vmatprep.subr.mxu0 0.0
    %1737 = vmatpush1.msra.mxu0 0.0
    %1738 = vmatprep.subr.mxu0 0.0
    %1739 = vmatpush1.msra.mxu0 0.0
    %1740 = vmatprep.subr.mxu0 0.0
    %1741 = vmatpush1.msra.mxu0 0.0
    %1742 = vmatprep.subr.mxu0 0.0
    %1743 = vmatpush1.msra.mxu0 0.0
    %1744 = vmatprep.subr.mxu0 0.0
    %1745 = vmatpush1.msra.mxu0 0.0
    %1746 = vmatprep.subr.mxu0 0.0
    %1747 = vmatpush1.msra.mxu0 0.0
    %1748 = vmatprep.subr.mxu0 0.0
    %1749 = vmatpush1.msra.mxu0 0.0
    %1750 = vmatprep.subr.mxu0 0.0
    %1751 = vmatpush1.msra.mxu0 0.0
    %1752 = vmatprep.subr.mxu0 0.0
    %1753 = vmatpush1.msra.mxu0 0.0
    %1754 = vmatprep.subr.mxu0 0.0
    %1755 = vmatpush1.msra.mxu0 0.0
    %1756 = vmatprep.subr.mxu0 0.0
    %1757 = vmatpush1.msra.mxu0 0.0
    %1758 = vmatprep.subr.mxu0 0.0
    %1759 = vmatpush1.msra.mxu0 0.0
    %1760 = vmatprep.subr.mxu0 0.0
    %1761 = vmatpush1.msra.mxu0 0.0
    %1762 = vmatprep.subr.mxu0 0.0
    %1763 = vmatpush1.msra.mxu0 0.0
    %1764 = vmatprep.subr.mxu0 0.0
    %1765 = vmatpush1.msra.mxu0 0.0
    %1766 = vmatprep.subr.mxu0 0.0
    %1767 = vmatpush1.msra.mxu0 0.0
    %1768 = vmatprep.subr.mxu0 0.0
    %1769 = vmatpush1.msra.mxu0 0.0
    %1770 = vmatprep.subr.mxu0 0.0
    %1771 = vmatpush1.msra.mxu0 0.0
    %1772 = vmatprep.subr.mxu0 0.0
    %1773 = vmatpush1.msra.mxu0 0.0
    %1774 = vmatprep.subr.mxu0 0.0
    %1775 = vmatpush1.msra.mxu0 0.0
    %1776 = vmatprep.subr.mxu0 0.0
    %1777 = vmatpush1.msra.mxu0 0.0
    %1778 = vmatprep.mubr.f32.mxu0 0.0
    %1779 = vmatmul.mubr.f32.gmra.mrb[0].mxu0 %v1710
    %v1780 = vpop.f32.mrb[0].mxu0
    %v1781 = vadd.f32 %v1611, %v1780
    %v1782 = vpop.f32.mrb[0].mxu0
    %1783 = vdwg.mxu0
    %1785 = vset.pattern.permute.xlu0 0
    %1786 = vperm.xlu0 %1785, %v1462
    %v1787 = vpop.permute.xlu0 %1786
    %1790 = vset.pattern.permute.xlu0 0
    %1791 = vperm.xlu0 %1790, %v1463
    %v1792 = vpop.permute.xlu0 %1791
    %v1794 = vmul.f32 %v1696, %v1787
    %v1795 = vmul.f32 %v1781, %v1792
    %v1798 = vrot.slane %v1795, 7
    %v1799 = vsel %vm612, %v1798, %v1794
    %1800 = vrot.lane.b32.xlu0 %v1799, 16
    %v1801 = vpop.permute.xlu0 %1800
    %vm1803 = vcmask 189568
    %1804 = vst.msk [vmem:[#allocation2] sm:$0x3] %vm1803, %v1801
    %v1805 = vsel %vm615, %v1798, %v1794
    %1806 = vrot.lane.b32.xlu0 %v1805, 24
    %v1807 = vpop.permute.xlu0 %1806
    %vm1809 = vcmask 256193
    %1810 = vst.msk [vmem:[#allocation2 - $0x1] sm:$0x6] %vm1809, %v1807
    %v1811 = vld [vmem:[#allocation2] sm:$0x3]
    %v1812 = vld [vmem:[%s4] sm:$0xff]
    %v1813 = vld [vmem:[%s4 + $0x8] sm:$0xff]
    %v1814 = vld [vmem:[%s4 + $0x10] sm:$0xff]
    %v1815 = vld [vmem:[%s4 + $0x18] sm:$0xff]
    %v1817 = vsel %vm179, %v1811, 0
    %1819 = vmatprep.subr.mxu0 0.0
    %1820 = vmatpush1.msra.mxu0 %v1812
    %1821 = vmatprep.subr.mxu0 0.0
    %1822 = vmatpush1.msra.mxu0 %v1813
    %1823 = vmatprep.subr.mxu0 0.0
    %1824 = vmatpush1.msra.mxu0 %v1814
    %1825 = vmatprep.subr.mxu0 0.0
    %1826 = vmatpush1.msra.mxu0 %v1815
    %1827 = vmatprep.subr.mxu0 0.0
    %1828 = vmatpush1.msra.mxu0 0.0
    %1829 = vmatprep.subr.mxu0 0.0
    %1830 = vmatpush1.msra.mxu0 0.0
    %1831 = vmatprep.subr.mxu0 0.0
    %1832 = vmatpush1.msra.mxu0 0.0
    %1833 = vmatprep.subr.mxu0 0.0
    %1834 = vmatpush1.msra.mxu0 0.0
    %1835 = vmatprep.subr.mxu0 0.0
    %1836 = vmatpush1.msra.mxu0 0.0
    %1837 = vmatprep.subr.mxu0 0.0
    %1838 = vmatpush1.msra.mxu0 0.0
    %1839 = vmatprep.subr.mxu0 0.0
    %1840 = vmatpush1.msra.mxu0 0.0
    %1841 = vmatprep.subr.mxu0 0.0
    %1842 = vmatpush1.msra.mxu0 0.0
    %1843 = vmatprep.subr.mxu0 0.0
    %1844 = vmatpush1.msra.mxu0 0.0
    %1845 = vmatprep.subr.mxu0 0.0
    %1846 = vmatpush1.msra.mxu0 0.0
    %1847 = vmatprep.subr.mxu0 0.0
    %1848 = vmatpush1.msra.mxu0 0.0
    %1849 = vmatprep.subr.mxu0 0.0
    %1850 = vmatpush1.msra.mxu0 0.0
    %1851 = vmatprep.subr.mxu0 0.0
    %1852 = vmatpush1.msra.mxu0 0.0
    %1853 = vmatprep.subr.mxu0 0.0
    %1854 = vmatpush1.msra.mxu0 0.0
    %1855 = vmatprep.subr.mxu0 0.0
    %1856 = vmatpush1.msra.mxu0 0.0
    %1857 = vmatprep.subr.mxu0 0.0
    %1858 = vmatpush1.msra.mxu0 0.0
    %1859 = vmatprep.subr.mxu0 0.0
    %1860 = vmatpush1.msra.mxu0 0.0
    %1861 = vmatprep.subr.mxu0 0.0
    %1862 = vmatpush1.msra.mxu0 0.0
    %1863 = vmatprep.subr.mxu0 0.0
    %1864 = vmatpush1.msra.mxu0 0.0
    %1865 = vmatprep.subr.mxu0 0.0
    %1866 = vmatpush1.msra.mxu0 0.0
    %1867 = vmatprep.subr.mxu0 0.0
    %1868 = vmatpush1.msra.mxu0 0.0
    %1869 = vmatprep.subr.mxu0 0.0
    %1870 = vmatpush1.msra.mxu0 0.0
    %1871 = vmatprep.subr.mxu0 0.0
    %1872 = vmatpush1.msra.mxu0 0.0
    %1873 = vmatprep.subr.mxu0 0.0
    %1874 = vmatpush1.msra.mxu0 0.0
    %1875 = vmatprep.subr.mxu0 0.0
    %1876 = vmatpush1.msra.mxu0 0.0
    %1877 = vmatprep.subr.mxu0 0.0
    %1878 = vmatpush1.msra.mxu0 0.0
    %1879 = vmatprep.subr.mxu0 0.0
    %1880 = vmatpush1.msra.mxu0 0.0
    %1881 = vmatprep.subr.mxu0 0.0
    %1882 = vmatpush1.msra.mxu0 0.0
    %1883 = vmatprep.mubr.f32.mxu0 0.0
    %1884 = vmatmul.mubr.f32.gmra.mrb[0].mxu0 %v1817
    %v1885 = vpop.f32.mrb[0].mxu0
    %v1886 = vadd.f32 0.0, %v1885
    %v1887 = vpop.f32.mrb[0].mxu0
    %1888 = vdwg.mxu0
    %vm1889 = vcmask 254976
    %1890 = vst.msk [vmem:[#allocation5] sm:$0x3] %vm1889, %v1886
    // Predicated region
    $region120: #{tpu_custom_call.1} parent=1 // pred_check
      _
    $region121: #{tpu_custom_call.1} parent=1 // pred_check_branch
      %1892 = sbr.rel (0) target = $region123
    $region122: #{tpu_custom_call.1} parent=1 // pred_region
      %s1894 = ssub.s32 32, 32
      %1895 = vsyncadd [#allocation6], %s1894
      %s1897 = sshll.u32 [#allocation5], 4
      %s1898 = int_to_ptr.vmem [resolvable:$true] %s1897
      %1900 = dma.vmem_to_hbm [thread:$0]  %s1898, 32, %s9, [#allocation6]
    $region123: #{tpu_custom_call.1} parent=1 // pred_fallthru
      _
    // Predicated region
    $region124: #{tpu_custom_call.1} parent=1 // pred_check
      _
    $region125: #{tpu_custom_call.1} parent=1 // pred_check_branch
      %1902 = sbr.rel (0) target = $region127
    $region126: #{tpu_custom_call.1} parent=1 // pred_region
      %s1903 = scalar_lea.vmem %s10, 8
      // Predicated region
      $region128: #{tpu_custom_call.1} parent=126 // pred_check
        _
      $region129: #{tpu_custom_call.1} parent=126 // pred_check_branch
        %1905 = sbr.rel (0) target = $region131
      $region130: #{tpu_custom_call.1} parent=126 // pred_region
        // Predicated region
        $region132: #{tpu_custom_call.1} parent=130 // pred_check
          _
        $region133: #{tpu_custom_call.1} parent=130 // pred_check_branch
          %1907 = sbr.rel target = $region135
        $region134: #{tpu_custom_call.1} parent=130 // pred_region
          // Predicated region
          $region147: #{tpu_custom_call.1} parent=134 // pred_check
            _
          $region148: #{tpu_custom_call.1} parent=134 // pred_check_branch
            %1924 = sbr.rel (0) target = $region150
          $region149: #{tpu_custom_call.1} parent=134 // pred_region
            loop: start=0, step=1, limit=1
            $region151: #{tpu_custom_call.1} parent=149 // loop_pre_header
              _
            $region152: #{tpu_custom_call.1} parent=149 // loop_header
              %s1927 = sphi 0, %s1931
              %p1928 = scmp.ge.s32.totalorder %s1927, 1
              %s1932 = sphi [#allocation7], [#allocation7]
              %s1933 = sphi %s1903, %s1903
            $region153: #{tpu_custom_call.1} parent=149 // loop_header_branch
              %1930 = sbr.rel (%p1928) target = $region157
            $region154: #{tpu_custom_call.1} parent=149 // loop_body
              %v1934 = vld [vmem:[%s1932] sm:$0x3]
              %1935 = vst [vmem:[%s1933] sm:$0x3] %v1934
              %v1936 = vld [vmem:[%s1932 + $0x2] sm:$0x3]
              %1937 = vst [vmem:[%s1933 + $0x20] sm:$0x3] %v1936
            $region155: #{tpu_custom_call.1} parent=149 // loop_footer
              %s1931 = sadd.s32 1, %s1927
            $region156: #{tpu_custom_call.1} parent=149 // loop_footer_branch
              %1926 = sbr.rel target = $region152
            $region157: #{tpu_custom_call.1} parent=149 // loop_exit
              _
          $region150: #{tpu_custom_call.1} parent=134 // pred_fallthru
            _
        $region135: #{tpu_custom_call.1} parent=130 // pred_fallthru
          _
        // Predicated region
        $region136: #{tpu_custom_call.1} parent=130 // pred_check
          _
        $region137: #{tpu_custom_call.1} parent=130 // pred_check_branch
          %1909 = sbr.rel (0) target = $region139
        $region138: #{tpu_custom_call.1} parent=130 // pred_region
          loop: start=0, step=1, limit=1
          $region140: #{tpu_custom_call.1} parent=138 // loop_pre_header
            _
          $region141: #{tpu_custom_call.1} parent=138 // loop_header
            %s1912 = sphi 0, %s1916
            %p1913 = scmp.ge.s32.totalorder %s1912, 1
            %s1917 = sphi [#allocation7], [#allocation7]
            %s1918 = sphi %s1903, %s1903
          $region142: #{tpu_custom_call.1} parent=138 // loop_header_branch
            %1915 = sbr.rel (%p1913) target = $region146
          $region143: #{tpu_custom_call.1} parent=138 // loop_body
            %v1919 = vld [vmem:[%s1917] sm:$0x3]
            %1920 = vst [vmem:[%s1918] sm:$0x3] %v1919
            %v1921 = vld [vmem:[%s1917 + $0x2] sm:$0x3]
            %1922 = vst [vmem:[%s1918 + $0x20] sm:$0x3] %v1921
          $region144: #{tpu_custom_call.1} parent=138 // loop_footer
            %s1916 = sadd.s32 1, %s1912
          $region145: #{tpu_custom_call.1} parent=138 // loop_footer_branch
            %1911 = sbr.rel target = $region141
          $region146: #{tpu_custom_call.1} parent=138 // loop_exit
            _
        $region139: #{tpu_custom_call.1} parent=130 // pred_fallthru
          _
      $region131: #{tpu_custom_call.1} parent=126 // pred_fallthru
        _
      %1938 = vnop
    $region127: #{tpu_custom_call.1} parent=1 // pred_fallthru
      _
    // Predicated region
    $region158: #{tpu_custom_call.1} parent=1 // pred_check
      _
    $region159: #{tpu_custom_call.1} parent=1 // pred_check_branch
      %1940 = sbr.rel (0) target = $region161
    $region160: #{tpu_custom_call.1} parent=1 // pred_region
      %s1941 = scalar_lea.vmem %s11, 8
      // Predicated region
      $region162: #{tpu_custom_call.1} parent=160 // pred_check
        _
      $region163: #{tpu_custom_call.1} parent=160 // pred_check_branch
        %1943 = sbr.rel (0) target = $region165
      $region164: #{tpu_custom_call.1} parent=160 // pred_region
        // Predicated region
        $region166: #{tpu_custom_call.1} parent=164 // pred_check
          _
        $region167: #{tpu_custom_call.1} parent=164 // pred_check_branch
          %1945 = sbr.rel target = $region169
        $region168: #{tpu_custom_call.1} parent=164 // pred_region
          // Predicated region
          $region181: #{tpu_custom_call.1} parent=168 // pred_check
            _
          $region182: #{tpu_custom_call.1} parent=168 // pred_check_branch
            %1962 = sbr.rel (0) target = $region184
          $region183: #{tpu_custom_call.1} parent=168 // pred_region
            loop: start=0, step=1, limit=1
            $region185: #{tpu_custom_call.1} parent=183 // loop_pre_header
              _
            $region186: #{tpu_custom_call.1} parent=183 // loop_header
              %s1965 = sphi 0, %s1969
              %p1966 = scmp.ge.s32.totalorder %s1965, 1
              %s1970 = sphi [#allocation8], [#allocation8]
              %s1971 = sphi %s1941, %s1941
            $region187: #{tpu_custom_call.1} parent=183 // loop_header_branch
              %1968 = sbr.rel (%p1966) target = $region191
            $region188: #{tpu_custom_call.1} parent=183 // loop_body
              %v1972 = vld [vmem:[%s1970] sm:$0x3]
              %1973 = vst [vmem:[%s1971] sm:$0x3] %v1972
              %v1974 = vld [vmem:[%s1970 + $0x2] sm:$0x3]
              %1975 = vst [vmem:[%s1971 + $0x20] sm:$0x3] %v1974
            $region189: #{tpu_custom_call.1} parent=183 // loop_footer
              %s1969 = sadd.s32 1, %s1965
            $region190: #{tpu_custom_call.1} parent=183 // loop_footer_branch
              %1964 = sbr.rel target = $region186
            $region191: #{tpu_custom_call.1} parent=183 // loop_exit
              _
          $region184: #{tpu_custom_call.1} parent=168 // pred_fallthru
            _
        $region169: #{tpu_custom_call.1} parent=164 // pred_fallthru
          _
        // Predicated region
        $region170: #{tpu_custom_call.1} parent=164 // pred_check
          _
        $region171: #{tpu_custom_call.1} parent=164 // pred_check_branch
          %1947 = sbr.rel (0) target = $region173
        $region172: #{tpu_custom_call.1} parent=164 // pred_region
          loop: start=0, step=1, limit=1
          $region174: #{tpu_custom_call.1} parent=172 // loop_pre_header
            _
          $region175: #{tpu_custom_call.1} parent=172 // loop_header
            %s1950 = sphi 0, %s1954
            %p1951 = scmp.ge.s32.totalorder %s1950, 1
            %s1955 = sphi [#allocation8], [#allocation8]
            %s1956 = sphi %s1941, %s1941
          $region176: #{tpu_custom_call.1} parent=172 // loop_header_branch
            %1953 = sbr.rel (%p1951) target = $region180
          $region177: #{tpu_custom_call.1} parent=172 // loop_body
            %v1957 = vld [vmem:[%s1955] sm:$0x3]
            %1958 = vst [vmem:[%s1956] sm:$0x3] %v1957
            %v1959 = vld [vmem:[%s1955 + $0x2] sm:$0x3]
            %1960 = vst [vmem:[%s1956 + $0x20] sm:$0x3] %v1959
          $region178: #{tpu_custom_call.1} parent=172 // loop_footer
            %s1954 = sadd.s32 1, %s1950
          $region179: #{tpu_custom_call.1} parent=172 // loop_footer_branch
            %1949 = sbr.rel target = $region175
          $region180: #{tpu_custom_call.1} parent=172 // loop_exit
            _
        $region173: #{tpu_custom_call.1} parent=164 // pred_fallthru
          _
      $region165: #{tpu_custom_call.1} parent=160 // pred_fallthru
        _
      %1976 = vnop
    $region161: #{tpu_custom_call.1} parent=1 // pred_fallthru
      _
    // Predicated region
    $region192: #{tpu_custom_call.1} parent=1 // pred_check
      _
    $region193: #{tpu_custom_call.1} parent=1 // pred_check_branch
      %1978 = sbr.rel (0) target = $region195
    $region194: #{tpu_custom_call.1} parent=1 // pred_region
      %1979 = dma.done [#allocation6], 32
    $region195: #{tpu_custom_call.1} parent=1 // pred_fallthru
      _
    // Predicated region
    $region196: #{tpu_custom_call.1} parent=1 // pred_check
      _
    $region197: #{tpu_custom_call.1} parent=1 // pred_check_branch
      %1981 = sbr.rel (0) target = $region199
    $region198: #{tpu_custom_call.1} parent=1 // pred_region
      _
    $region199: #{tpu_custom_call.1} parent=1 // pred_fallthru
      _
    // Predicated region
    $region200: #{tpu_custom_call.1} parent=1 // pred_check
      _
    $region201: #{tpu_custom_call.1} parent=1 // pred_check_branch
      %1983 = sbr.rel (0) target = $region203
    $region202: #{tpu_custom_call.1} parent=1 // pred_region
      _
    $region203: #{tpu_custom_call.1} parent=1 // pred_fallthru
      _
    %1984 = vsyncpa [#allocation6], 1

</llo_original>
